<compile_context>
chip_gen: v5e
topology: v5e:2x2
jax: 0.10.0
libtpu: 0.0.40
codegen_flags: <defaults>
</compile_context>

<pallas_src>
import jax
import jax.numpy as jnp
from jax import lax
from jax.experimental import pallas as pl
from jax.experimental.pallas import tpu as pltpu

VOCAB = 7
EMBED = 16
HIDDEN = 32
GATE = 128   # per-gate lane width (HIDDEN=32 zero-padded to a full 128-lane slot)
VPAD = 128   # lane-dense padded logits width (VOCAB=7 -> 128)


def gru_fc_kernel(gi_ref, whh_ref, bhn_ref, wfc_ref, bfc_ref, out_ref, h_scratch):
    """One (batch-tile, time-tile) grid step of the GRU recurrence + final Linear.

    gi_ref : (T_TILE, B_TILE, 3*GATE) bf16  precomputed x_t@W_ih.T + b_ih (+ b_hr|b_hz folded)
    whh_ref: (GATE, 3*GATE) bf16            W_hh.T, zero-padded rows/cols
    bhn_ref: (1, GATE) f32                  b_hn (n-gate hidden bias), lane-padded
    wfc_ref: (GATE, VPAD) bf16              fc.weight.T, zero-padded
    bfc_ref: (1, VPAD) f32
    out_ref: (B_TILE, VPAD) f32             lane-dense logits (written at last time block)
    h_scratch: (B_TILE, GATE) f32           hidden state persisting across time blocks
    """
    t_blk = pl.program_id(1)
    Tt = gi_ref.shape[0]
    Bt = h_scratch.shape[0]
    G = h_scratch.shape[1]

    @pl.when(t_blk == 0)
    def _():
        h_scratch[...] = jnp.zeros_like(h_scratch)

    whh = whh_ref[...]                                           # bf16, stays resident
    # Hoisted bias broadcast: once per time block, not once per step.
    bhn = jnp.broadcast_to(bhn_ref[...], (Bt, G))                # (Bt, G) f32

    def step(t, h_prev):
        gi = gi_ref[t].astype(jnp.float32)                       # (Bt, 3G)
        gh = jnp.dot(h_prev.astype(jnp.bfloat16), whh,
                     preferred_element_type=jnp.float32)         # (Bt, 3G)
        # Whole-vreg (128-lane) gate slices; PyTorch gate order r|z|n.
        r = jax.nn.sigmoid(gi[:, 0:G] + gh[:, 0:G])
        z = jax.nn.sigmoid(gi[:, G:2 * G] + gh[:, G:2 * G])
        n = jnp.tanh(gi[:, 2 * G:3 * G] + r * (gh[:, 2 * G:3 * G] + bhn))
        return (1.0 - z) * n + z * h_prev

    # h carried in vregs across the unrolled T_TILE steps; one scratch read/write per block.
    h = lax.fori_loop(0, Tt, step, h_scratch[...], unroll=True)
    h_scratch[...] = h

    @pl.when(t_blk == pl.num_programs(1) - 1)
    def _():
        out_ref[...] = (jnp.dot(h.astype(jnp.bfloat16), wfc_ref[...],
                                preferred_element_type=jnp.float32)
                        + bfc_ref[...])


def init_params(key, vocab_size=VOCAB, embed_dim=EMBED, hidden_size=HIDDEN):
    ks = jax.random.split(key, 8)
    stdv = 1.0 / jnp.sqrt(hidden_size)
    u = lambda k, shape, s: jax.random.uniform(k, shape, jnp.float32, -s, s)
    return {
        "embedding": jax.random.normal(ks[0], (vocab_size, embed_dim), jnp.float32),
        # stored pre-transposed for x @ W.T style matmuls, gate order r|z|n
        "w_ih_t": u(ks[1], (embed_dim, 3 * hidden_size), stdv),
        "w_hh_t": u(ks[2], (hidden_size, 3 * hidden_size), stdv),
        "b_ih": u(ks[3], (1, 3 * hidden_size), stdv),
        "b_hh": u(ks[4], (1, 3 * hidden_size), stdv),
        "w_fc_t": u(ks[5], (hidden_size, vocab_size), stdv),
        "b_fc": u(ks[6], (1, vocab_size), stdv),
    }


def _pad_gate_cols(m, gate_width):
    """Zero-pad each of the 3 gate blocks along the last axis from HIDDEN to gate_width."""
    parts = jnp.split(m, 3, axis=-1)
    pad = [(0, 0)] * (m.ndim - 1) + [(0, gate_width - HIDDEN)]
    return jnp.concatenate([jnp.pad(p, pad) for p in parts], axis=-1)


def _pick_t_tile(T, max_tile=32):
    t = min(T, max_tile)
    while T % t:
        t -= 1
    return t


def _pick_b_tile(BP, max_tile=256):
    b = min(BP, max_tile)
    while BP % b:
        b -= 16
    return b


@jax.jit
def ball_predictor_forward(tokens, params):
    B, T = tokens.shape
    H = HIDDEN
    BP = ((B + 15) // 16) * 16              # sublane-aligned batch (16 for bf16 packing)
    B_TILE = _pick_b_tile(BP)
    T_TILE = _pick_t_tile(T)

    # --- Precompute the input-gate lookup table (VOCAB, 3*GATE) in glue JAX ---
    gi_table = params["embedding"] @ params["w_ih_t"] + params["b_ih"]     # (V, 3H)
    # Fold the r/z slices of b_hh into the table (b_hn must stay per-step, scaled by r).
    gi_table = gi_table.at[:, :2 * H].add(params["b_hh"][:, :2 * H])
    gi_table = _pad_gate_cols(gi_table, GATE)                              # (V, 3*GATE)
    # Gather per token directly in time-major order; pad batch sublanes; bf16 operands.
    gi_all = gi_table[tokens.T]                                            # (T, B, 3*GATE)
    gi_all = jnp.pad(gi_all, ((0, 0), (0, BP - B), (0, 0))).astype(jnp.bfloat16)

    # --- Lane-aligned, zero-padded recurrent / output weights ---
    w_hh_p = jnp.pad(_pad_gate_cols(params["w_hh_t"], GATE),
                     ((0, GATE - H), (0, 0))).astype(jnp.bfloat16)         # (GATE, 3*GATE)
    b_hn_p = jnp.pad(params["b_hh"][:, 2 * H:], ((0, 0), (0, GATE - H)))   # (1, GATE) f32
    w_fc_p = jnp.pad(params["w_fc_t"],
                     ((0, GATE - H), (0, VPAD - VOCAB))).astype(jnp.bfloat16)  # (GATE, VPAD)
    b_fc_p = jnp.pad(params["b_fc"], ((0, 0), (0, VPAD - VOCAB)))          # (1, VPAD) f32

    # --- VMEM budget (double-buffered gi blocks + resident weights + out + h scratch) ---
    gi_blk = T_TILE * B_TILE * 3 * GATE * 2
    wts = GATE * 3 * GATE * 2 + GATE * VPAD * 2 + (GATE + VPAD) * 4
    need = 2 * gi_blk + 2 * wts + 2 * (B_TILE * VPAD * 4) + B_TILE * GATE * 4
    vmem_limit = int(max(4 << 20, min(48 << 20, 4 * need)))

    grid = (BP // B_TILE, T // T_TILE)

    out_p = pl.pallas_call(
        gru_fc_kernel,
        out_shape=jax.ShapeDtypeStruct((BP, VPAD), jnp.float32),
        grid_spec=pltpu.PrefetchScalarGridSpec(
            num_scalar_prefetch=0,
            grid=grid,
            in_specs=[
                pl.BlockSpec((T_TILE, B_TILE, 3 * GATE), lambda b, t: (t, b, 0)),
                pl.BlockSpec((GATE, 3 * GATE), lambda b, t: (0, 0)),
                pl.BlockSpec((1, GATE), lambda b, t: (0, 0)),
                pl.BlockSpec((GATE, VPAD), lambda b, t: (0, 0)),
                pl.BlockSpec((1, VPAD), lambda b, t: (0, 0)),
            ],
            out_specs=pl.BlockSpec((B_TILE, VPAD), lambda b, t: (b, 0)),
            scratch_shapes=[pltpu.VMEM((B_TILE, GATE), jnp.float32)],
        ),
        compiler_params=pltpu.CompilerParams(
            dimension_semantics=("parallel", "arbitrary"),
            vmem_limit_bytes=vmem_limit),
    )(gi_all, w_hh_p, b_hn_p, w_fc_p, b_fc_p)

    return out_p[:B, :VOCAB]


def reference_forward(tokens, params):
    """Pure-JAX f32 reference matching PyTorch GRU semantics (gate order r, z, n)."""
    H = HIDDEN
    emb = params["embedding"][tokens]            # (B, T, E)
    B = tokens.shape[0]
    h0 = jnp.zeros((B, H), jnp.float32)

    def step(h, x_t):
        gi = x_t @ params["w_ih_t"] + params["b_ih"]
        gh = h @ params["w_hh_t"] + params["b_hh"]
        r = jax.nn.sigmoid(gi[:, :H] + gh[:, :H])
        z = jax.nn.sigmoid(gi[:, H:2 * H] + gh[:, H:2 * H])
        n = jnp.tanh(gi[:, 2 * H:] + r * gh[:, 2 * H:])
        h_new = (1.0 - z) * n + z * h
        return h_new, None

    h_T, _ = lax.scan(step, h0, jnp.transpose(emb, (1, 0, 2)))
    return h_T @ params["w_fc_t"] + params["b_fc"]


if __name__ == "__main__":
    key = jax.random.PRNGKey(0)
    pkey, xkey = jax.random.split(key)
    params = init_params(pkey)

    B, T = 2, 8
    tokens = jax.random.randint(xkey, (B, T), 0, VOCAB, dtype=jnp.int32)

    logits = jax.block_until_ready(ball_predictor_forward(tokens, params))
    ref = jax.block_until_ready(reference_forward(tokens, params))

    assert logits.shape == (B, VOCAB)
    # Tolerance relaxed vs 1e-5: matmul operands (gi table / W_hh / fc weight) are bf16.
    assert jnp.allclose(logits, ref, atol=3e-2, rtol=3e-2), (
        float(jnp.max(jnp.abs(logits - ref))))
    print("KERNEL_OK")
</pallas_src>

<mosaic_0001>
module attributes {stable_mosaic.version = 11 : i64} {
  func.func @gru_fc_kernel(%arg0: i32, %arg1: i32, %arg2: memref<8x16x384xbf16, #tpu.memory_space<vmem>>, %arg3: memref<128x384xbf16, #tpu.memory_space<vmem>>, %arg4: memref<1x128xf32, #tpu.memory_space<vmem>>, %arg5: memref<128x128xbf16, #tpu.memory_space<vmem>>, %arg6: memref<1x128xf32, #tpu.memory_space<vmem>>, %arg7: memref<16x128xf32, #tpu.memory_space<vmem>>, %arg8: memref<16x128xf32, #tpu.memory_space<vmem>>) attributes {dimension_semantics = [#tpu.dimension_semantics<parallel>, #tpu.dimension_semantics<arbitrary>], iteration_bounds = array<i64: 1, 1>, scalar_prefetch = 0 : i64, scratch_operands = 1 : i64, tpu.core_type = #tpu.core_type<tc>, window_params = [{transform_indices = @transform_0, window_bounds = array<i64: 8, 16, 384>}, {pipeline_mode = #tpu.pipeline_mode<synchronous>, transform_indices = @transform_1, window_bounds = array<i64: 128, 384>}, {pipeline_mode = #tpu.pipeline_mode<synchronous>, transform_indices = @transform_2, window_bounds = array<i64: 1, 128>}, {pipeline_mode = #tpu.pipeline_mode<synchronous>, transform_indices = @transform_3, window_bounds = array<i64: 128, 128>}, {pipeline_mode = #tpu.pipeline_mode<synchronous>, transform_indices = @transform_4, window_bounds = array<i64: 1, 128>}, {transform_indices = @transform_5, window_bounds = array<i64: 16, 128>}]} {
    %c0_i32 = arith.constant 0 : i32
    %0 = arith.cmpi eq, %arg1, %c0_i32 : i32
    %1 = arith.extui %0 : i1 to i32
    %c0_i32_0 = arith.constant 0 : i32
    %2 = arith.cmpi ne, %1, %c0_i32_0 : i32
    scf.if %2 {
      %cst_58 = arith.constant 0.000000e+00 : f32
      %276 = vector.broadcast %cst_58 : f32 to vector<16x128xf32>
      %c0_59 = arith.constant 0 : index
      %c0_60 = arith.constant 0 : index
      %277 = vector.load %arg8[%c0_59, %c0_60] : memref<16x128xf32, #tpu.memory_space<vmem>>, vector<16x128xf32>
      tpu.vector_store %arg8[%c0_59, %c0_60], %276 {strides = array<i32>} : memref<16x128xf32, #tpu.memory_space<vmem>>, vector<16x128xf32>,
    } else {
    }
    %c0 = arith.constant 0 : index
    %c0_1 = arith.constant 0 : index
    %3 = vector.load %arg3[%c0, %c0_1] : memref<128x384xbf16, #tpu.memory_space<vmem>>, vector<128x384xbf16>
    %c0_2 = arith.constant 0 : index
    %c0_3 = arith.constant 0 : index
    %4 = vector.load %arg4[%c0_2, %c0_3] : memref<1x128xf32, #tpu.memory_space<vmem>>, vector<1x128xf32>
    %5 = vector.shape_cast %4 : vector<1x128xf32> to vector<1x128xf32>
    %6 = vector.broadcast %5 : vector<1x128xf32> to vector<16x128xf32>
    %c0_4 = arith.constant 0 : index
    %c0_5 = arith.constant 0 : index
    %7 = vector.load %arg8[%c0_4, %c0_5] : memref<16x128xf32, #tpu.memory_space<vmem>>, vector<16x128xf32>
    %c0_i32_6 = arith.constant 0 : i32
    %8 = arith.index_cast %c0_i32_6 : i32 to index
    %c0_7 = arith.constant 0 : index
    %c0_8 = arith.constant 0 : index
    %9 = vector.load %arg2[%8, %c0_7, %c0_8] : memref<8x16x384xbf16, #tpu.memory_space<vmem>>, vector<1x16x384xbf16>
    %10 = vector.shape_cast %9 : vector<1x16x384xbf16> to vector<16x384xbf16>
    %11 = arith.extf %10 : vector<16x384xbf16> to vector<16x384xf32>
    %12 = arith.truncf %7 : vector<16x128xf32> to vector<16x128xbf16>
    %cst = arith.constant dense<0.000000e+00> : vector<16x384xf32>
    %13 = tpu.matmul %12, %3, %cst {dimension_numbers = #tpu.dot_dimension_numbers<[1], [0], [0], [1], [0, 0, 1, 1], [], []>} : vector<16x128xbf16>, vector<128x384xbf16>, vector<16x384xf32> -> vector<16x384xf32>
    %14 = vector.extract_strided_slice %11 {offsets = [0, 0], sizes = [16, 128], strides = [1, 1]} : vector<16x384xf32> to vector<16x128xf32>
    %15 = vector.extract_strided_slice %13 {offsets = [0, 0], sizes = [16, 128], strides = [1, 1]} : vector<16x384xf32> to vector<16x128xf32>
    %16 = arith.addf %14, %15 : vector<16x128xf32>
    %17 = arith.negf %16 : vector<16x128xf32>
    %18 = math.exp %17 : vector<16x128xf32>
    %cst_9 = arith.constant 1.000000e+00 : f32
    %19 = vector.broadcast %cst_9 : f32 to vector<16x128xf32>
    %20 = arith.addf %19, %18 : vector<16x128xf32>
    %21 = arith.divf %19, %20 : vector<16x128xf32>
    %22 = vector.extract_strided_slice %11 {offsets = [0, 128], sizes = [16, 128], strides = [1, 1]} : vector<16x384xf32> to vector<16x128xf32>
    %23 = vector.extract_strided_slice %13 {offsets = [0, 128], sizes = [16, 128], strides = [1, 1]} : vector<16x384xf32> to vector<16x128xf32>
    %24 = arith.addf %22, %23 : vector<16x128xf32>
    %25 = arith.negf %24 : vector<16x128xf32>
    %26 = math.exp %25 : vector<16x128xf32>
    %cst_10 = arith.constant 1.000000e+00 : f32
    %27 = vector.broadcast %cst_10 : f32 to vector<16x128xf32>
    %28 = arith.addf %27, %26 : vector<16x128xf32>
    %29 = arith.divf %27, %28 : vector<16x128xf32>
    %30 = vector.extract_strided_slice %11 {offsets = [0, 256], sizes = [16, 128], strides = [1, 1]} : vector<16x384xf32> to vector<16x128xf32>
    %31 = vector.extract_strided_slice %13 {offsets = [0, 256], sizes = [16, 128], strides = [1, 1]} : vector<16x384xf32> to vector<16x128xf32>
    %32 = arith.addf %31, %6 : vector<16x128xf32>
    %33 = arith.mulf %21, %32 : vector<16x128xf32>
    %34 = arith.addf %30, %33 : vector<16x128xf32>
    %35 = math.tanh %34 : vector<16x128xf32>
    %cst_11 = arith.constant 1.000000e+00 : f32
    %36 = vector.broadcast %cst_11 : f32 to vector<16x128xf32>
    %37 = arith.subf %36, %29 : vector<16x128xf32>
    %38 = arith.mulf %37, %35 : vector<16x128xf32>
    %39 = arith.mulf %29, %7 : vector<16x128xf32>
    %40 = arith.addf %38, %39 : vector<16x128xf32>
    %c1_i32 = arith.constant 1 : i32
    %41 = arith.index_cast %c1_i32 : i32 to index
    %c0_12 = arith.constant 0 : index
    %c0_13 = arith.constant 0 : index
    %42 = vector.load %arg2[%41, %c0_12, %c0_13] : memref<8x16x384xbf16, #tpu.memory_space<vmem>>, vector<1x16x384xbf16>
    %43 = vector.shape_cast %42 : vector<1x16x384xbf16> to vector<16x384xbf16>
    %44 = arith.extf %43 : vector<16x384xbf16> to vector<16x384xf32>
    %45 = arith.truncf %40 : vector<16x128xf32> to vector<16x128xbf16>
    %cst_14 = arith.constant dense<0.000000e+00> : vector<16x384xf32>
    %46 = tpu.matmul %45, %3, %cst_14 {dimension_numbers = #tpu.dot_dimension_numbers<[1], [0], [0], [1], [0, 0, 1, 1], [], []>} : vector<16x128xbf16>, vector<128x384xbf16>, vector<16x384xf32> -> vector<16x384xf32>
    %47 = vector.extract_strided_slice %44 {offsets = [0, 0], sizes = [16, 128], strides = [1, 1]} : vector<16x384xf32> to vector<16x128xf32>
    %48 = vector.extract_strided_slice %46 {offsets = [0, 0], sizes = [16, 128], strides = [1, 1]} : vector<16x384xf32> to vector<16x128xf32>
    %49 = arith.addf %47, %48 : vector<16x128xf32>
    %50 = arith.negf %49 : vector<16x128xf32>
    %51 = math.exp %50 : vector<16x128xf32>
    %cst_15 = arith.constant 1.000000e+00 : f32
    %52 = vector.broadcast %cst_15 : f32 to vector<16x128xf32>
    %53 = arith.addf %52, %51 : vector<16x128xf32>
    %54 = arith.divf %52, %53 : vector<16x128xf32>
    %55 = vector.extract_strided_slice %44 {offsets = [0, 128], sizes = [16, 128], strides = [1, 1]} : vector<16x384xf32> to vector<16x128xf32>
    %56 = vector.extract_strided_slice %46 {offsets = [0, 128], sizes = [16, 128], strides = [1, 1]} : vector<16x384xf32> to vector<16x128xf32>
    %57 = arith.addf %55, %56 : vector<16x128xf32>
    %58 = arith.negf %57 : vector<16x128xf32>
    %59 = math.exp %58 : vector<16x128xf32>
    %cst_16 = arith.constant 1.000000e+00 : f32
    %60 = vector.broadcast %cst_16 : f32 to vector<16x128xf32>
    %61 = arith.addf %60, %59 : vector<16x128xf32>
    %62 = arith.divf %60, %61 : vector<16x128xf32>
    %63 = vector.extract_strided_slice %44 {offsets = [0, 256], sizes = [16, 128], strides = [1, 1]} : vector<16x384xf32> to vector<16x128xf32>
    %64 = vector.extract_strided_slice %46 {offsets = [0, 256], sizes = [16, 128], strides = [1, 1]} : vector<16x384xf32> to vector<16x128xf32>
    %65 = arith.addf %64, %6 : vector<16x128xf32>
    %66 = arith.mulf %54, %65 : vector<16x128xf32>
    %67 = arith.addf %63, %66 : vector<16x128xf32>
    %68 = math.tanh %67 : vector<16x128xf32>
    %cst_17 = arith.constant 1.000000e+00 : f32
    %69 = vector.broadcast %cst_17 : f32 to vector<16x128xf32>
    %70 = arith.subf %69, %62 : vector<16x128xf32>
    %71 = arith.mulf %70, %68 : vector<16x128xf32>
    %72 = arith.mulf %62, %40 : vector<16x128xf32>
    %73 = arith.addf %71, %72 : vector<16x128xf32>
    %c2_i32 = arith.constant 2 : i32
    %74 = arith.index_cast %c2_i32 : i32 to index
    %c0_18 = arith.constant 0 : index
    %c0_19 = arith.constant 0 : index
    %75 = vector.load %arg2[%74, %c0_18, %c0_19] : memref<8x16x384xbf16, #tpu.memory_space<vmem>>, vector<1x16x384xbf16>
    %76 = vector.shape_cast %75 : vector<1x16x384xbf16> to vector<16x384xbf16>
    %77 = arith.extf %76 : vector<16x384xbf16> to vector<16x384xf32>
    %78 = arith.truncf %73 : vector<16x128xf32> to vector<16x128xbf16>
    %cst_20 = arith.constant dense<0.000000e+00> : vector<16x384xf32>
    %79 = tpu.matmul %78, %3, %cst_20 {dimension_numbers = #tpu.dot_dimension_numbers<[1], [0], [0], [1], [0, 0, 1, 1], [], []>} : vector<16x128xbf16>, vector<128x384xbf16>, vector<16x384xf32> -> vector<16x384xf32>
    %80 = vector.extract_strided_slice %77 {offsets = [0, 0], sizes = [16, 128], strides = [1, 1]} : vector<16x384xf32> to vector<16x128xf32>
    %81 = vector.extract_strided_slice %79 {offsets = [0, 0], sizes = [16, 128], strides = [1, 1]} : vector<16x384xf32> to vector<16x128xf32>
    %82 = arith.addf %80, %81 : vector<16x128xf32>
    %83 = arith.negf %82 : vector<16x128xf32>
    %84 = math.exp %83 : vector<16x128xf32>
    %cst_21 = arith.constant 1.000000e+00 : f32
    %85 = vector.broadcast %cst_21 : f32 to vector<16x128xf32>
    %86 = arith.addf %85, %84 : vector<16x128xf32>
    %87 = arith.divf %85, %86 : vector<16x128xf32>
    %88 = vector.extract_strided_slice %77 {offsets = [0, 128], sizes = [16, 128], strides = [1, 1]} : vector<16x384xf32> to vector<16x128xf32>
    %89 = vector.extract_strided_slice %79 {offsets = [0, 128], sizes = [16, 128], strides = [1, 1]} : vector<16x384xf32> to vector<16x128xf32>
    %90 = arith.addf %88, %89 : vector<16x128xf32>
    %91 = arith.negf %90 : vector<16x128xf32>
    %92 = math.exp %91 : vector<16x128xf32>
    %cst_22 = arith.constant 1.000000e+00 : f32
    %93 = vector.broadcast %cst_22 : f32 to vector<16x128xf32>
    %94 = arith.addf %93, %92 : vector<16x128xf32>
    %95 = arith.divf %93, %94 : vector<16x128xf32>
    %96 = vector.extract_strided_slice %77 {offsets = [0, 256], sizes = [16, 128], strides = [1, 1]} : vector<16x384xf32> to vector<16x128xf32>
    %97 = vector.extract_strided_slice %79 {offsets = [0, 256], sizes = [16, 128], strides = [1, 1]} : vector<16x384xf32> to vector<16x128xf32>
    %98 = arith.addf %97, %6 : vector<16x128xf32>
    %99 = arith.mulf %87, %98 : vector<16x128xf32>
    %100 = arith.addf %96, %99 : vector<16x128xf32>
    %101 = math.tanh %100 : vector<16x128xf32>
    %cst_23 = arith.constant 1.000000e+00 : f32
    %102 = vector.broadcast %cst_23 : f32 to vector<16x128xf32>
    %103 = arith.subf %102, %95 : vector<16x128xf32>
    %104 = arith.mulf %103, %101 : vector<16x128xf32>
    %105 = arith.mulf %95, %73 : vector<16x128xf32>
    %106 = arith.addf %104, %105 : vector<16x128xf32>
    %c3_i32 = arith.constant 3 : i32
    %107 = arith.index_cast %c3_i32 : i32 to index
    %c0_24 = arith.constant 0 : index
    %c0_25 = arith.constant 0 : index
    %108 = vector.load %arg2[%107, %c0_24, %c0_25] : memref<8x16x384xbf16, #tpu.memory_space<vmem>>, vector<1x16x384xbf16>
    %109 = vector.shape_cast %108 : vector<1x16x384xbf16> to vector<16x384xbf16>
    %110 = arith.extf %109 : vector<16x384xbf16> to vector<16x384xf32>
    %111 = arith.truncf %106 : vector<16x128xf32> to vector<16x128xbf16>
    %cst_26 = arith.constant dense<0.000000e+00> : vector<16x384xf32>
    %112 = tpu.matmul %111, %3, %cst_26 {dimension_numbers = #tpu.dot_dimension_numbers<[1], [0], [0], [1], [0, 0, 1, 1], [], []>} : vector<16x128xbf16>, vector<128x384xbf16>, vector<16x384xf32> -> vector<16x384xf32>
    %113 = vector.extract_strided_slice %110 {offsets = [0, 0], sizes = [16, 128], strides = [1, 1]} : vector<16x384xf32> to vector<16x128xf32>
    %114 = vector.extract_strided_slice %112 {offsets = [0, 0], sizes = [16, 128], strides = [1, 1]} : vector<16x384xf32> to vector<16x128xf32>
    %115 = arith.addf %113, %114 : vector<16x128xf32>
    %116 = arith.negf %115 : vector<16x128xf32>
    %117 = math.exp %116 : vector<16x128xf32>
    %cst_27 = arith.constant 1.000000e+00 : f32
    %118 = vector.broadcast %cst_27 : f32 to vector<16x128xf32>
    %119 = arith.addf %118, %117 : vector<16x128xf32>
    %120 = arith.divf %118, %119 : vector<16x128xf32>
    %121 = vector.extract_strided_slice %110 {offsets = [0, 128], sizes = [16, 128], strides = [1, 1]} : vector<16x384xf32> to vector<16x128xf32>
    %122 = vector.extract_strided_slice %112 {offsets = [0, 128], sizes = [16, 128], strides = [1, 1]} : vector<16x384xf32> to vector<16x128xf32>
    %123 = arith.addf %121, %122 : vector<16x128xf32>
    %124 = arith.negf %123 : vector<16x128xf32>
    %125 = math.exp %124 : vector<16x128xf32>
    %cst_28 = arith.constant 1.000000e+00 : f32
    %126 = vector.broadcast %cst_28 : f32 to vector<16x128xf32>
    %127 = arith.addf %126, %125 : vector<16x128xf32>
    %128 = arith.divf %126, %127 : vector<16x128xf32>
    %129 = vector.extract_strided_slice %110 {offsets = [0, 256], sizes = [16, 128], strides = [1, 1]} : vector<16x384xf32> to vector<16x128xf32>
    %130 = vector.extract_strided_slice %112 {offsets = [0, 256], sizes = [16, 128], strides = [1, 1]} : vector<16x384xf32> to vector<16x128xf32>
    %131 = arith.addf %130, %6 : vector<16x128xf32>
    %132 = arith.mulf %120, %131 : vector<16x128xf32>
    %133 = arith.addf %129, %132 : vector<16x128xf32>
    %134 = math.tanh %133 : vector<16x128xf32>
    %cst_29 = arith.constant 1.000000e+00 : f32
    %135 = vector.broadcast %cst_29 : f32 to vector<16x128xf32>
    %136 = arith.subf %135, %128 : vector<16x128xf32>
    %137 = arith.mulf %136, %134 : vector<16x128xf32>
    %138 = arith.mulf %128, %106 : vector<16x128xf32>
    %139 = arith.addf %137, %138 : vector<16x128xf32>
    %c4_i32 = arith.constant 4 : i32
    %140 = arith.index_cast %c4_i32 : i32 to index
    %c0_30 = arith.constant 0 : index
    %c0_31 = arith.constant 0 : index
    %141 = vector.load %arg2[%140, %c0_30, %c0_31] : memref<8x16x384xbf16, #tpu.memory_space<vmem>>, vector<1x16x384xbf16>
    %142 = vector.shape_cast %141 : vector<1x16x384xbf16> to vector<16x384xbf16>
    %143 = arith.extf %142 : vector<16x384xbf16> to vector<16x384xf32>
    %144 = arith.truncf %139 : vector<16x128xf32> to vector<16x128xbf16>
    %cst_32 = arith.constant dense<0.000000e+00> : vector<16x384xf32>
    %145 = tpu.matmul %144, %3, %cst_32 {dimension_numbers = #tpu.dot_dimension_numbers<[1], [0], [0], [1], [0, 0, 1, 1], [], []>} : vector<16x128xbf16>, vector<128x384xbf16>, vector<16x384xf32> -> vector<16x384xf32>
    %146 = vector.extract_strided_slice %143 {offsets = [0, 0], sizes = [16, 128], strides = [1, 1]} : vector<16x384xf32> to vector<16x128xf32>
    %147 = vector.extract_strided_slice %145 {offsets = [0, 0], sizes = [16, 128], strides = [1, 1]} : vector<16x384xf32> to vector<16x128xf32>
    %148 = arith.addf %146, %147 : vector<16x128xf32>
    %149 = arith.negf %148 : vector<16x128xf32>
    %150 = math.exp %149 : vector<16x128xf32>
    %cst_33 = arith.constant 1.000000e+00 : f32
    %151 = vector.broadcast %cst_33 : f32 to vector<16x128xf32>
    %152 = arith.addf %151, %150 : vector<16x128xf32>
    %153 = arith.divf %151, %152 : vector<16x128xf32>
    %154 = vector.extract_strided_slice %143 {offsets = [0, 128], sizes = [16, 128], strides = [1, 1]} : vector<16x384xf32> to vector<16x128xf32>
    %155 = vector.extract_strided_slice %145 {offsets = [0, 128], sizes = [16, 128], strides = [1, 1]} : vector<16x384xf32> to vector<16x128xf32>
    %156 = arith.addf %154, %155 : vector<16x128xf32>
    %157 = arith.negf %156 : vector<16x128xf32>
    %158 = math.exp %157 : vector<16x128xf32>
    %cst_34 = arith.constant 1.000000e+00 : f32
    %159 = vector.broadcast %cst_34 : f32 to vector<16x128xf32>
    %160 = arith.addf %159, %158 : vector<16x128xf32>
    %161 = arith.divf %159, %160 : vector<16x128xf32>
    %162 = vector.extract_strided_slice %143 {offsets = [0, 256], sizes = [16, 128], strides = [1, 1]} : vector<16x384xf32> to vector<16x128xf32>
    %163 = vector.extract_strided_slice %145 {offsets = [0, 256], sizes = [16, 128], strides = [1, 1]} : vector<16x384xf32> to vector<16x128xf32>
    %164 = arith.addf %163, %6 : vector<16x128xf32>
    %165 = arith.mulf %153, %164 : vector<16x128xf32>
    %166 = arith.addf %162, %165 : vector<16x128xf32>
    %167 = math.tanh %166 : vector<16x128xf32>
    %cst_35 = arith.constant 1.000000e+00 : f32
    %168 = vector.broadcast %cst_35 : f32 to vector<16x128xf32>
    %169 = arith.subf %168, %161 : vector<16x128xf32>
    %170 = arith.mulf %169, %167 : vector<16x128xf32>
    %171 = arith.mulf %161, %139 : vector<16x128xf32>
    %172 = arith.addf %170, %171 : vector<16x128xf32>
    %c5_i32 = arith.constant 5 : i32
    %173 = arith.index_cast %c5_i32 : i32 to index
    %c0_36 = arith.constant 0 : index
    %c0_37 = arith.constant 0 : index
    %174 = vector.load %arg2[%173, %c0_36, %c0_37] : memref<8x16x384xbf16, #tpu.memory_space<vmem>>, vector<1x16x384xbf16>
    %175 = vector.shape_cast %174 : vector<1x16x384xbf16> to vector<16x384xbf16>
    %176 = arith.extf %175 : vector<16x384xbf16> to vector<16x384xf32>
    %177 = arith.truncf %172 : vector<16x128xf32> to vector<16x128xbf16>
    %cst_38 = arith.constant dense<0.000000e+00> : vector<16x384xf32>
    %178 = tpu.matmul %177, %3, %cst_38 {dimension_numbers = #tpu.dot_dimension_numbers<[1], [0], [0], [1], [0, 0, 1, 1], [], []>} : vector<16x128xbf16>, vector<128x384xbf16>, vector<16x384xf32> -> vector<16x384xf32>
    %179 = vector.extract_strided_slice %176 {offsets = [0, 0], sizes = [16, 128], strides = [1, 1]} : vector<16x384xf32> to vector<16x128xf32>
    %180 = vector.extract_strided_slice %178 {offsets = [0, 0], sizes = [16, 128], strides = [1, 1]} : vector<16x384xf32> to vector<16x128xf32>
    %181 = arith.addf %179, %180 : vector<16x128xf32>
    %182 = arith.negf %181 : vector<16x128xf32>
    %183 = math.exp %182 : vector<16x128xf32>
    %cst_39 = arith.constant 1.000000e+00 : f32
    %184 = vector.broadcast %cst_39 : f32 to vector<16x128xf32>
    %185 = arith.addf %184, %183 : vector<16x128xf32>
    %186 = arith.divf %184, %185 : vector<16x128xf32>
    %187 = vector.extract_strided_slice %176 {offsets = [0, 128], sizes = [16, 128], strides = [1, 1]} : vector<16x384xf32> to vector<16x128xf32>
    %188 = vector.extract_strided_slice %178 {offsets = [0, 128], sizes = [16, 128], strides = [1, 1]} : vector<16x384xf32> to vector<16x128xf32>
    %189 = arith.addf %187, %188 : vector<16x128xf32>
    %190 = arith.negf %189 : vector<16x128xf32>
    %191 = math.exp %190 : vector<16x128xf32>
    %cst_40 = arith.constant 1.000000e+00 : f32
    %192 = vector.broadcast %cst_40 : f32 to vector<16x128xf32>
    %193 = arith.addf %192, %191 : vector<16x128xf32>
    %194 = arith.divf %192, %193 : vector<16x128xf32>
    %195 = vector.extract_strided_slice %176 {offsets = [0, 256], sizes = [16, 128], strides = [1, 1]} : vector<16x384xf32> to vector<16x128xf32>
    %196 = vector.extract_strided_slice %178 {offsets = [0, 256], sizes = [16, 128], strides = [1, 1]} : vector<16x384xf32> to vector<16x128xf32>
    %197 = arith.addf %196, %6 : vector<16x128xf32>
    %198 = arith.mulf %186, %197 : vector<16x128xf32>
    %199 = arith.addf %195, %198 : vector<16x128xf32>
    %200 = math.tanh %199 : vector<16x128xf32>
    %cst_41 = arith.constant 1.000000e+00 : f32
    %201 = vector.broadcast %cst_41 : f32 to vector<16x128xf32>
    %202 = arith.subf %201, %194 : vector<16x128xf32>
    %203 = arith.mulf %202, %200 : vector<16x128xf32>
    %204 = arith.mulf %194, %172 : vector<16x128xf32>
    %205 = arith.addf %203, %204 : vector<16x128xf32>
    %c6_i32 = arith.constant 6 : i32
    %206 = arith.index_cast %c6_i32 : i32 to index
    %c0_42 = arith.constant 0 : index
    %c0_43 = arith.constant 0 : index
    %207 = vector.load %arg2[%206, %c0_42, %c0_43] : memref<8x16x384xbf16, #tpu.memory_space<vmem>>, vector<1x16x384xbf16>
    %208 = vector.shape_cast %207 : vector<1x16x384xbf16> to vector<16x384xbf16>
    %209 = arith.extf %208 : vector<16x384xbf16> to vector<16x384xf32>
    %210 = arith.truncf %205 : vector<16x128xf32> to vector<16x128xbf16>
    %cst_44 = arith.constant dense<0.000000e+00> : vector<16x384xf32>
    %211 = tpu.matmul %210, %3, %cst_44 {dimension_numbers = #tpu.dot_dimension_numbers<[1], [0], [0], [1], [0, 0, 1, 1], [], []>} : vector<16x128xbf16>, vector<128x384xbf16>, vector<16x384xf32> -> vector<16x384xf32>
    %212 = vector.extract_strided_slice %209 {offsets = [0, 0], sizes = [16, 128], strides = [1, 1]} : vector<16x384xf32> to vector<16x128xf32>
    %213 = vector.extract_strided_slice %211 {offsets = [0, 0], sizes = [16, 128], strides = [1, 1]} : vector<16x384xf32> to vector<16x128xf32>
    %214 = arith.addf %212, %213 : vector<16x128xf32>
    %215 = arith.negf %214 : vector<16x128xf32>
    %216 = math.exp %215 : vector<16x128xf32>
    %cst_45 = arith.constant 1.000000e+00 : f32
    %217 = vector.broadcast %cst_45 : f32 to vector<16x128xf32>
    %218 = arith.addf %217, %216 : vector<16x128xf32>
    %219 = arith.divf %217, %218 : vector<16x128xf32>
    %220 = vector.extract_strided_slice %209 {offsets = [0, 128], sizes = [16, 128], strides = [1, 1]} : vector<16x384xf32> to vector<16x128xf32>
    %221 = vector.extract_strided_slice %211 {offsets = [0, 128], sizes = [16, 128], strides = [1, 1]} : vector<16x384xf32> to vector<16x128xf32>
    %222 = arith.addf %220, %221 : vector<16x128xf32>
    %223 = arith.negf %222 : vector<16x128xf32>
    %224 = math.exp %223 : vector<16x128xf32>
    %cst_46 = arith.constant 1.000000e+00 : f32
    %225 = vector.broadcast %cst_46 : f32 to vector<16x128xf32>
    %226 = arith.addf %225, %224 : vector<16x128xf32>
    %227 = arith.divf %225, %226 : vector<16x128xf32>
    %228 = vector.extract_strided_slice %209 {offsets = [0, 256], sizes = [16, 128], strides = [1, 1]} : vector<16x384xf32> to vector<16x128xf32>
    %229 = vector.extract_strided_slice %211 {offsets = [0, 256], sizes = [16, 128], strides = [1, 1]} : vector<16x384xf32> to vector<16x128xf32>
    %230 = arith.addf %229, %6 : vector<16x128xf32>
    %231 = arith.mulf %219, %230 : vector<16x128xf32>
    %232 = arith.addf %228, %231 : vector<16x128xf32>
    %233 = math.tanh %232 : vector<16x128xf32>
    %cst_47 = arith.constant 1.000000e+00 : f32
    %234 = vector.broadcast %cst_47 : f32 to vector<16x128xf32>
    %235 = arith.subf %234, %227 : vector<16x128xf32>
    %236 = arith.mulf %235, %233 : vector<16x128xf32>
    %237 = arith.mulf %227, %205 : vector<16x128xf32>
    %238 = arith.addf %236, %237 : vector<16x128xf32>
    %c7_i32 = arith.constant 7 : i32
    %239 = arith.index_cast %c7_i32 : i32 to index
    %c0_48 = arith.constant 0 : index
    %c0_49 = arith.constant 0 : index
    %240 = vector.load %arg2[%239, %c0_48, %c0_49] : memref<8x16x384xbf16, #tpu.memory_space<vmem>>, vector<1x16x384xbf16>
    %241 = vector.shape_cast %240 : vector<1x16x384xbf16> to vector<16x384xbf16>
    %242 = arith.extf %241 : vector<16x384xbf16> to vector<16x384xf32>
    %243 = arith.truncf %238 : vector<16x128xf32> to vector<16x128xbf16>
    %cst_50 = arith.constant dense<0.000000e+00> : vector<16x384xf32>
    %244 = tpu.matmul %243, %3, %cst_50 {dimension_numbers = #tpu.dot_dimension_numbers<[1], [0], [0], [1], [0, 0, 1, 1], [], []>} : vector<16x128xbf16>, vector<128x384xbf16>, vector<16x384xf32> -> vector<16x384xf32>
    %245 = vector.extract_strided_slice %242 {offsets = [0, 0], sizes = [16, 128], strides = [1, 1]} : vector<16x384xf32> to vector<16x128xf32>
    %246 = vector.extract_strided_slice %244 {offsets = [0, 0], sizes = [16, 128], strides = [1, 1]} : vector<16x384xf32> to vector<16x128xf32>
    %247 = arith.addf %245, %246 : vector<16x128xf32>
    %248 = arith.negf %247 : vector<16x128xf32>
    %249 = math.exp %248 : vector<16x128xf32>
    %cst_51 = arith.constant 1.000000e+00 : f32
    %250 = vector.broadcast %cst_51 : f32 to vector<16x128xf32>
    %251 = arith.addf %250, %249 : vector<16x128xf32>
    %252 = arith.divf %250, %251 : vector<16x128xf32>
    %253 = vector.extract_strided_slice %242 {offsets = [0, 128], sizes = [16, 128], strides = [1, 1]} : vector<16x384xf32> to vector<16x128xf32>
    %254 = vector.extract_strided_slice %244 {offsets = [0, 128], sizes = [16, 128], strides = [1, 1]} : vector<16x384xf32> to vector<16x128xf32>
    %255 = arith.addf %253, %254 : vector<16x128xf32>
    %256 = arith.negf %255 : vector<16x128xf32>
    %257 = math.exp %256 : vector<16x128xf32>
    %cst_52 = arith.constant 1.000000e+00 : f32
    %258 = vector.broadcast %cst_52 : f32 to vector<16x128xf32>
    %259 = arith.addf %258, %257 : vector<16x128xf32>
    %260 = arith.divf %258, %259 : vector<16x128xf32>
    %261 = vector.extract_strided_slice %242 {offsets = [0, 256], sizes = [16, 128], strides = [1, 1]} : vector<16x384xf32> to vector<16x128xf32>
    %262 = vector.extract_strided_slice %244 {offsets = [0, 256], sizes = [16, 128], strides = [1, 1]} : vector<16x384xf32> to vector<16x128xf32>
    %263 = arith.addf %262, %6 : vector<16x128xf32>
    %264 = arith.mulf %252, %263 : vector<16x128xf32>
    %265 = arith.addf %261, %264 : vector<16x128xf32>
    %266 = math.tanh %265 : vector<16x128xf32>
    %cst_53 = arith.constant 1.000000e+00 : f32
    %267 = vector.broadcast %cst_53 : f32 to vector<16x128xf32>
    %268 = arith.subf %267, %260 : vector<16x128xf32>
    %269 = arith.mulf %268, %266 : vector<16x128xf32>
    %270 = arith.mulf %260, %238 : vector<16x128xf32>
    %271 = arith.addf %269, %270 : vector<16x128xf32>
    %c8_i32 = arith.constant 8 : i32
    %c0_54 = arith.constant 0 : index
    %c0_55 = arith.constant 0 : index
    %272 = vector.load %arg8[%c0_54, %c0_55] : memref<16x128xf32, #tpu.memory_space<vmem>>, vector<16x128xf32>
    tpu.vector_store %arg8[%c0_54, %c0_55], %271 {strides = array<i32>} : memref<16x128xf32, #tpu.memory_space<vmem>>, vector<16x128xf32>,
    %c0_i32_56 = arith.constant 0 : i32
    %273 = arith.cmpi eq, %arg1, %c0_i32_56 : i32
    %274 = arith.extui %273 : i1 to i32
    %c0_i32_57 = arith.constant 0 : i32
    %275 = arith.cmpi ne, %274, %c0_i32_57 : i32
    scf.if %275 {
      %276 = arith.truncf %271 : vector<16x128xf32> to vector<16x128xbf16>
      %c0_58 = arith.constant 0 : index
      %c0_59 = arith.constant 0 : index
      %277 = vector.load %arg5[%c0_58, %c0_59] : memref<128x128xbf16, #tpu.memory_space<vmem>>, vector<128x128xbf16>
      %cst_60 = arith.constant dense<0.000000e+00> : vector<16x128xf32>
      %278 = tpu.matmul %276, %277, %cst_60 {dimension_numbers = #tpu.dot_dimension_numbers<[1], [0], [0], [1], [0, 0, 1, 1], [], []>} : vector<16x128xbf16>, vector<128x128xbf16>, vector<16x128xf32> -> vector<16x128xf32>
      %c0_61 = arith.constant 0 : index
      %c0_62 = arith.constant 0 : index
      %279 = vector.load %arg6[%c0_61, %c0_62] : memref<1x128xf32, #tpu.memory_space<vmem>>, vector<1x128xf32>
      %280 = vector.broadcast %279 : vector<1x128xf32> to vector<16x128xf32>
      %281 = arith.addf %278, %280 : vector<16x128xf32>
      %c0_63 = arith.constant 0 : index
      %c0_64 = arith.constant 0 : index
      %282 = vector.load %arg7[%c0_63, %c0_64] : memref<16x128xf32, #tpu.memory_space<vmem>>, vector<16x128xf32>
      tpu.vector_store %arg7[%c0_63, %c0_64], %281 {strides = array<i32>} : memref<16x128xf32, #tpu.memory_space<vmem>>, vector<16x128xf32>,
    } else {
    }
    return
  }
  func.func @transform_0(%arg0: i32, %arg1: i32) -> (i32, i32, i32) {
    %c0_i32 = arith.constant 0 : i32
    %c0_i32_0 = arith.constant 0 : i32
    return %arg1, %arg0, %c0_i32 : i32, i32, i32
  }
  func.func @transform_1(%arg0: i32, %arg1: i32) -> (i32, i32) {
    %c0_i32 = arith.constant 0 : i32
    %c0_i32_0 = arith.constant 0 : i32
    %c0_i32_1 = arith.constant 0 : i32
    return %c0_i32, %c0_i32_0 : i32, i32
  }
  func.func @transform_2(%arg0: i32, %arg1: i32) -> (i32, i32) {
    %c0_i32 = arith.constant 0 : i32
    %c0_i32_0 = arith.constant 0 : i32
    %c0_i32_1 = arith.constant 0 : i32
    return %c0_i32, %c0_i32_0 : i32, i32
  }
  func.func @transform_3(%arg0: i32, %arg1: i32) -> (i32, i32) {
    %c0_i32 = arith.constant 0 : i32
    %c0_i32_0 = arith.constant 0 : i32
    %c0_i32_1 = arith.constant 0 : i32
    return %c0_i32, %c0_i32_0 : i32, i32
  }
  func.func @transform_4(%arg0: i32, %arg1: i32) -> (i32, i32) {
    %c0_i32 = arith.constant 0 : i32
    %c0_i32_0 = arith.constant 0 : i32
    %c0_i32_1 = arith.constant 0 : i32
    return %c0_i32, %c0_i32_0 : i32, i32
  }
  func.func @transform_5(%arg0: i32, %arg1: i32) -> (i32, i32) {
    %c0_i32 = arith.constant 0 : i32
    %c0_i32_0 = arith.constant 0 : i32
    return %arg0, %c0_i32 : i32, i32
  }
}

</mosaic_0001>

<llo_original>
// kernel: ball_predictor_forward.1
$region0: #{ball_predictor_forward.1}
  #allocation0 [shape = 'u32[]', space=smem, size = 0x4, offset = 0x4, fixed_abs, tag = 'smem constant byte address 0x4 - core index']
  #allocation1 [shape = 'u32[72,128]{1,0:T(1,128)}', space=vmem, size = 0x9000, scoped, tag = 'internal scratch']
  #allocation2 [shape = 'f32[16,128]{1,0:T(8,128)}', space=vmem, size = 0x2000, scoped, tag = 'scratch operand']
  %s0 = inlined_call_operand.vmem [shape: bf16[8,16,384], index: 0, kind: input, shape index: {}]
  %s1 = inlined_call_operand.vmem [shape: bf16[128,384], index: 1, kind: input, shape index: {}]
  %s2 = inlined_call_operand.vmem [shape: f32[1,128], index: 2, kind: input, shape index: {}]
  %s3 = inlined_call_operand.vmem [shape: bf16[128,128], index: 3, kind: input, shape index: {}]
  %s4 = inlined_call_operand.vmem [shape: f32[1,128], index: 4, kind: input, shape index: {}]
  %s5 = inlined_call_operand.vmem [shape: f32[16,128], index: 5, kind: output, shape index: {}]
  %s6 = sld [smem:[#allocation0]]
  $region38: #{ball_predictor_forward.1} parent=0
    _
  %s8 = ssub.s32 1, %s6
  %s9 = scalar_select 0, %s8, %s6
  // Predicated region
  $region2: #{ball_predictor_forward.1} parent=0 // pred_check
    _
  $region3: #{ball_predictor_forward.1} parent=0 // pred_check_branch
    %11 = sbr.rel (0) target = $region5
  $region4: #{ball_predictor_forward.1} parent=0 // pred_region
    _
  $region5: #{ball_predictor_forward.1} parent=0 // pred_fallthru
    _
  // Predicated region
  $region6: #{ball_predictor_forward.1} parent=0 // pred_check
    _
  $region7: #{ball_predictor_forward.1} parent=0 // pred_check_branch
    %13 = sbr.rel (0) target = $region9
  $region8: #{ball_predictor_forward.1} parent=0 // pred_region
    _
  $region9: #{ball_predictor_forward.1} parent=0 // pred_fallthru
    _
  // Predicated region
  $region10: #{ball_predictor_forward.1} parent=0 // pred_check
    _
  $region11: #{ball_predictor_forward.1} parent=0 // pred_check_branch
    %15 = sbr.rel (0) target = $region13
  $region12: #{ball_predictor_forward.1} parent=0 // pred_region
    _
  $region13: #{ball_predictor_forward.1} parent=0 // pred_fallthru
    _
  // Predicated region
  $region14: #{ball_predictor_forward.1} parent=0 // pred_check
    _
  $region15: #{ball_predictor_forward.1} parent=0 // pred_check_branch
    %17 = sbr.rel (0) target = $region17
  $region16: #{ball_predictor_forward.1} parent=0 // pred_region
    _
  $region17: #{ball_predictor_forward.1} parent=0 // pred_fallthru
    _
  // Predicated region
  $region18: #{ball_predictor_forward.1} parent=0 // pred_check
    _
  $region19: #{ball_predictor_forward.1} parent=0 // pred_check_branch
    %19 = sbr.rel (0) target = $region21
  $region20: #{ball_predictor_forward.1} parent=0 // pred_region
    _
  $region21: #{ball_predictor_forward.1} parent=0 // pred_fallthru
    _
  %p20 = scmp.eq.s32.totalorder 0, 0
  // Predicated region
  $region22: #{ball_predictor_forward.1} parent=0 // pred_check
    %p21 = pneg %p20
  $region23: #{ball_predictor_forward.1} parent=0 // pred_check_branch
    %23 = sbr.rel (%p21) target = $region25
  $region24: #{ball_predictor_forward.1} parent=0 // pred_region
    %24 = vst [vmem:[#allocation2] sm:$0xff] 0.0
    %25 = vst [vmem:[#allocation2 + $0x8] sm:$0xff] 0.0
  $region25: #{ball_predictor_forward.1} parent=0 // pred_fallthru
    _
  %v26 = vld [vmem:[%s1] sm:$0xff]
  %v27 = vld [vmem:[%s1 + $0x8] sm:$0xf]
  %v28 = vld [vmem:[%s1 + $0xc] sm:$0xff]
  %v29 = vld [vmem:[%s1 + $0x14] sm:$0xf]
  %v30 = vld [vmem:[%s1 + $0x18] sm:$0xff]
  %v31 = vld [vmem:[%s1 + $0x20] sm:$0xf]
  %v32 = vld [vmem:[%s1 + $0x24] sm:$0xff]
  %v33 = vld [vmem:[%s1 + $0x2c] sm:$0xf]
  %v34 = vld [vmem:[%s1 + $0x30] sm:$0xff]
  %v35 = vld [vmem:[%s1 + $0x38] sm:$0xf]
  %v36 = vld [vmem:[%s1 + $0x3c] sm:$0xff]
  %v37 = vld [vmem:[%s1 + $0x44] sm:$0xf]
  %v38 = vld [vmem:[%s1 + $0x48] sm:$0xff]
  %v39 = vld [vmem:[%s1 + $0x50] sm:$0xf]
  %v40 = vld [vmem:[%s1 + $0x54] sm:$0xff]
  %v41 = vld [vmem:[%s1 + $0x5c] sm:$0xf]
  %v42 = vld [vmem:[%s1 + $0x60] sm:$0xff]
  %v43 = vld [vmem:[%s1 + $0x68] sm:$0xf]
  %v44 = vld [vmem:[%s1 + $0x6c] sm:$0xff]
  %v45 = vld [vmem:[%s1 + $0x74] sm:$0xf]
  %v46 = vld [vmem:[%s1 + $0x78] sm:$0xff]
  %v47 = vld [vmem:[%s1 + $0x80] sm:$0xf]
  %v48 = vld [vmem:[%s1 + $0x84] sm:$0xff]
  %v49 = vld [vmem:[%s1 + $0x8c] sm:$0xf]
  %v50 = vld [vmem:[%s1 + $0x90] sm:$0xff]
  %v51 = vld [vmem:[%s1 + $0x98] sm:$0xf]
  %v52 = vld [vmem:[%s1 + $0x9c] sm:$0xff]
  %v53 = vld [vmem:[%s1 + $0xa4] sm:$0xf]
  %v54 = vld [vmem:[%s1 + $0xa8] sm:$0xff]
  %v55 = vld [vmem:[%s1 + $0xb0] sm:$0xf]
  %v56 = vld [vmem:[%s1 + $0xb4] sm:$0xff]
  %v57 = vld [vmem:[%s1 + $0xbc] sm:$0xf]
  %v58 = vld [vmem:[%s2] sm:$0x1]
  %v60 = vperm.slane %v58, 0
  %v62 = vld [vmem:[#allocation2] sm:$0xff]
  %v63 = vld [vmem:[#allocation2 + $0x8] sm:$0xff]
  %v64 = vld [vmem:[%s0] sm:$0xff]
  %v65 = vld [vmem:[%s0 + $0x8] sm:$0xf]
  %v66 = vld [vmem:[%s0 + $0xc] sm:$0xff]
  %v67 = vld [vmem:[%s0 + $0x14] sm:$0xf]
  %v68 = vunpack.c.l.bf16 %v64
  %v69 = vunpack.c.h.bf16 %v64
  %v70 = vunpack.c.l.bf16 %v65
  %v71 = vunpack.c.l.bf16 %v66
  %v72 = vunpack.c.h.bf16 %v66
  %v73 = vunpack.c.l.bf16 %v67
  %v74 = vpack.c.bf16 %v63, %v62
  %v107 = vunpack.c.l.b16 %v26
  %v108 = vunpack.c.h.b16 %v26
  %v109 = vunpack.c.l.b16 %v27
  %v110 = vunpack.c.l.b16 %v28
  %v111 = vunpack.c.h.b16 %v28
  %v112 = vunpack.c.l.b16 %v29
  %v113 = vunpack.c.l.b16 %v30
  %v114 = vunpack.c.h.b16 %v30
  %v115 = vunpack.c.l.b16 %v31
  %v116 = vunpack.c.l.b16 %v32
  %v117 = vunpack.c.h.b16 %v32
  %v118 = vunpack.c.l.b16 %v33
  %v119 = vunpack.c.l.b16 %v34
  %v120 = vunpack.c.h.b16 %v34
  %v121 = vunpack.c.l.b16 %v35
  %v122 = vunpack.c.l.b16 %v36
  %v123 = vunpack.c.h.b16 %v36
  %v124 = vunpack.c.l.b16 %v37
  %v125 = vunpack.c.l.b16 %v38
  %v126 = vunpack.c.h.b16 %v38
  %v127 = vunpack.c.l.b16 %v39
  %v128 = vunpack.c.l.b16 %v40
  %v129 = vunpack.c.h.b16 %v40
  %v130 = vunpack.c.l.b16 %v41
  %v131 = vunpack.c.l.b16 %v42
  %v132 = vunpack.c.h.b16 %v42
  %v133 = vunpack.c.l.b16 %v43
  %v134 = vunpack.c.l.b16 %v44
  %v135 = vunpack.c.h.b16 %v44
  %v136 = vunpack.c.l.b16 %v45
  %v137 = vunpack.c.l.b16 %v46
  %v138 = vunpack.c.h.b16 %v46
  %v139 = vunpack.c.l.b16 %v47
  %v140 = vunpack.c.l.b16 %v48
  %v141 = vunpack.c.h.b16 %v48
  %v142 = vunpack.c.l.b16 %v49
  %v143 = vunpack.c.l.b16 %v50
  %v144 = vunpack.c.h.b16 %v50
  %v145 = vunpack.c.l.b16 %v51
  %v146 = vunpack.c.l.b16 %v52
  %v147 = vunpack.c.h.b16 %v52
  %v148 = vunpack.c.l.b16 %v53
  %v149 = vunpack.c.l.b16 %v54
  %v150 = vunpack.c.h.b16 %v54
  %v151 = vunpack.c.l.b16 %v55
  %v152 = vunpack.c.l.b16 %v56
  %v153 = vunpack.c.h.b16 %v56
  %v154 = vunpack.c.l.b16 %v57
  %v155 = vpack.c.b16 %v110, %v107
  %v156 = vpack.c.b16 %v111, %v108
  %v157 = vpack.c.b16 %v112, %v109
  %v158 = vpack.c.b16 %v116, %v113
  %v159 = vpack.c.b16 %v117, %v114
  %v160 = vpack.c.b16 %v118, %v115
  %v161 = vpack.c.b16 %v122, %v119
  %v162 = vpack.c.b16 %v123, %v120
  %v163 = vpack.c.b16 %v124, %v121
  %v164 = vpack.c.b16 %v128, %v125
  %v165 = vpack.c.b16 %v129, %v126
  %v166 = vpack.c.b16 %v130, %v127
  %v167 = vpack.c.b16 %v134, %v131
  %v168 = vpack.c.b16 %v135, %v132
  %v169 = vpack.c.b16 %v136, %v133
  %v170 = vpack.c.b16 %v140, %v137
  %v171 = vpack.c.b16 %v141, %v138
  %v172 = vpack.c.b16 %v142, %v139
  %v173 = vpack.c.b16 %v146, %v143
  %v174 = vpack.c.b16 %v147, %v144
  %v175 = vpack.c.b16 %v148, %v145
  %v176 = vpack.c.b16 %v152, %v149
  %v177 = vpack.c.b16 %v153, %v150
  %v178 = vpack.c.b16 %v154, %v151
  %203 = vmatpush.bf16.msra.mxu0 %v176
  %204 = vmatpush.bf16.msra.mxu0 %v173
  %205 = vmatpush.bf16.msra.mxu0 %v170
  %206 = vmatpush.bf16.msra.mxu0 %v167
  %207 = vmatpush.bf16.msra.mxu0 %v164
  %208 = vmatpush.bf16.msra.mxu0 %v161
  %209 = vmatpush.bf16.msra.mxu0 %v158
  %210 = vmatpush.bf16.msra.mxu0 %v155
  %211 = vmatmul.bf16.gmra.mxu0 %v74
  %v212 = vpop.f32.mrf.mxu0
  %v213 = vadd.f32 0.0, %v212
  %v214 = vpop.f32.mrf.mxu0
  %v215 = vadd.f32 0.0, %v214
  %216 = vdwg.mxu0
  %217 = vmatpush.bf16.msra.mxu0 %v177
  %218 = vmatpush.bf16.msra.mxu0 %v174
  %219 = vmatpush.bf16.msra.mxu0 %v171
  %220 = vmatpush.bf16.msra.mxu0 %v168
  %221 = vmatpush.bf16.msra.mxu0 %v165
  %222 = vmatpush.bf16.msra.mxu0 %v162
  %223 = vmatpush.bf16.msra.mxu0 %v159
  %224 = vmatpush.bf16.msra.mxu0 %v156
  %225 = vmatmul.bf16.gmra.mxu0 %v74
  %v226 = vpop.f32.mrf.mxu0
  %v227 = vadd.f32 0.0, %v226
  %v228 = vpop.f32.mrf.mxu0
  %v229 = vadd.f32 0.0, %v228
  %230 = vdwg.mxu0
  %231 = vmatpush.bf16.msra.mxu0 %v178
  %232 = vmatpush.bf16.msra.mxu0 %v175
  %233 = vmatpush.bf16.msra.mxu0 %v172
  %234 = vmatpush.bf16.msra.mxu0 %v169
  %235 = vmatpush.bf16.msra.mxu0 %v166
  %236 = vmatpush.bf16.msra.mxu0 %v163
  %237 = vmatpush.bf16.msra.mxu0 %v160
  %238 = vmatpush.bf16.msra.mxu0 %v157
  %239 = vmatmul.bf16.gmra.mxu0 %v74
  %v240 = vpop.f32.mrf.mxu0
  %v241 = vadd.f32 0.0, %v240
  %v242 = vpop.f32.mrf.mxu0
  %v243 = vadd.f32 0.0, %v242
  %244 = vdwg.mxu0
  %v245 = vadd.f32 %v68, %v213
  %v246 = vadd.f32 %v71, %v215
  %v247 = vxor.u32 %v245, 2147483648
  %v248 = vxor.u32 %v246, 2147483648
  %v249 = vmul.f32 %v247, 1.442695
  %v250 = vpow.pop %v249
  %v251 = vmul.f32 %v248, 1.442695
  %v252 = vpow.pop %v251
  %v253 = vadd.f32 %v250, 1.0
  %v254 = vadd.f32 %v252, 1.0
  %v255 = vrcp.pop %v253
  %v256 = vmul.f32 %v253, %v255
  %v257 = vsub.f32 1.0, %v256
  %v258 = vmul.f32 %v255, %v257
  %v259 = vadd.f32 %v255, %v258
  %vm260 = vweird.f32 %v253
  %vm261 = vweird.f32 %v255
  %vm262 = vmor %vm260, %vm261
  %v263 = vsel %vm262, %v255, %v259
  %v264 = vand.u32 2147483647, %v253
  %vm265 = vcmp.eq.f32.partialorder %v264, 8.507059e+37
  %v266 = vand.u32 %v253, 2147483648
  %v267 = vor.u32 1.1754944e-38, %v266
  %v268 = vsel %vm265, %v267, %v263
  %v269 = vmul.f32 1.0, %v268
  %v270 = vrcp.pop %v254
  %v271 = vmul.f32 %v254, %v270
  %v272 = vsub.f32 1.0, %v271
  %v273 = vmul.f32 %v270, %v272
  %v274 = vadd.f32 %v270, %v273
  %vm275 = vweird.f32 %v254
  %vm276 = vweird.f32 %v270
  %vm277 = vmor %vm275, %vm276
  %v278 = vsel %vm277, %v270, %v274
  %v279 = vand.u32 2147483647, %v254
  %vm280 = vcmp.eq.f32.partialorder %v279, 8.507059e+37
  %v281 = vand.u32 %v254, 2147483648
  %v282 = vor.u32 1.1754944e-38, %v281
  %v283 = vsel %vm280, %v282, %v278
  %v284 = vmul.f32 1.0, %v283
  %v285 = vadd.f32 %v69, %v227
  %v286 = vadd.f32 %v72, %v229
  %v287 = vxor.u32 %v285, 2147483648
  %v288 = vxor.u32 %v286, 2147483648
  %v289 = vmul.f32 %v287, 1.442695
  %v290 = vpow.pop %v289
  %v291 = vmul.f32 %v288, 1.442695
  %v292 = vpow.pop %v291
  %v293 = vadd.f32 %v290, 1.0
  %v294 = vadd.f32 %v292, 1.0
  %v295 = vrcp.pop %v293
  %v296 = vmul.f32 %v293, %v295
  %v297 = vsub.f32 1.0, %v296
  %v298 = vmul.f32 %v295, %v297
  %v299 = vadd.f32 %v295, %v298
  %vm300 = vweird.f32 %v293
  %vm301 = vweird.f32 %v295
  %vm302 = vmor %vm300, %vm301
  %v303 = vsel %vm302, %v295, %v299
  %v304 = vand.u32 2147483647, %v293
  %vm305 = vcmp.eq.f32.partialorder %v304, 8.507059e+37
  %v306 = vand.u32 %v293, 2147483648
  %v307 = vor.u32 1.1754944e-38, %v306
  %v308 = vsel %vm305, %v307, %v303
  %v309 = vmul.f32 1.0, %v308
  %v310 = vrcp.pop %v294
  %v311 = vmul.f32 %v294, %v310
  %v312 = vsub.f32 1.0, %v311
  %v313 = vmul.f32 %v310, %v312
  %v314 = vadd.f32 %v310, %v313
  %vm315 = vweird.f32 %v294
  %vm316 = vweird.f32 %v310
  %vm317 = vmor %vm315, %vm316
  %v318 = vsel %vm317, %v310, %v314
  %v319 = vand.u32 2147483647, %v294
  %vm320 = vcmp.eq.f32.partialorder %v319, 8.507059e+37
  %v321 = vand.u32 %v294, 2147483648
  %v322 = vor.u32 1.1754944e-38, %v321
  %v323 = vsel %vm320, %v322, %v318
  %v324 = vmul.f32 1.0, %v323
  %v325 = vadd.f32 %v241, %v60
  %v326 = vadd.f32 %v243, %v60
  %v327 = vmul.f32 %v269, %v325
  %v328 = vmul.f32 %v284, %v326
  %v329 = vadd.f32 %v70, %v327
  %v330 = vadd.f32 %v73, %v328
  %v331 = vtanh.pop %v329
  %v332 = vtanh.pop %v330
  %v333 = vsub.f32 1.0, %v309
  %v334 = vsub.f32 1.0, %v324
  %v335 = vmul.f32 %v333, %v331
  %v336 = vmul.f32 %v334, %v332
  %v337 = vmul.f32 %v309, %v62
  %v338 = vmul.f32 %v324, %v63
  %v339 = vadd.f32 %v335, %v337
  %v340 = vadd.f32 %v336, %v338
  %s341 = scalar_lea.vmem %s0, 24
  %v342 = vld [vmem:[%s341] sm:$0xff]
  %v343 = vld [vmem:[%s341 + $0x8] sm:$0xf]
  %v344 = vld [vmem:[%s341 + $0xc] sm:$0xff]
  %v345 = vld [vmem:[%s341 + $0x14] sm:$0xf]
  %v346 = vunpack.c.l.bf16 %v342
  %v347 = vunpack.c.h.bf16 %v342
  %v348 = vunpack.c.l.bf16 %v343
  %v349 = vunpack.c.l.bf16 %v344
  %v350 = vunpack.c.h.bf16 %v344
  %v351 = vunpack.c.l.bf16 %v345
  %v352 = vpack.c.bf16 %v340, %v339
  %353 = vmatpush.bf16.msra.mxu0 %v176
  %354 = vmatpush.bf16.msra.mxu0 %v173
  %355 = vmatpush.bf16.msra.mxu0 %v170
  %356 = vmatpush.bf16.msra.mxu0 %v167
  %357 = vmatpush.bf16.msra.mxu0 %v164
  %358 = vmatpush.bf16.msra.mxu0 %v161
  %359 = vmatpush.bf16.msra.mxu0 %v158
  %360 = vmatpush.bf16.msra.mxu0 %v155
  %361 = vmatmul.bf16.gmra.mxu0 %v352
  %v362 = vpop.f32.mrf.mxu0
  %v363 = vadd.f32 0.0, %v362
  %v364 = vpop.f32.mrf.mxu0
  %v365 = vadd.f32 0.0, %v364
  %366 = vdwg.mxu0
  %367 = vmatpush.bf16.msra.mxu0 %v177
  %368 = vmatpush.bf16.msra.mxu0 %v174
  %369 = vmatpush.bf16.msra.mxu0 %v171
  %370 = vmatpush.bf16.msra.mxu0 %v168
  %371 = vmatpush.bf16.msra.mxu0 %v165
  %372 = vmatpush.bf16.msra.mxu0 %v162
  %373 = vmatpush.bf16.msra.mxu0 %v159
  %374 = vmatpush.bf16.msra.mxu0 %v156
  %375 = vmatmul.bf16.gmra.mxu0 %v352
  %v376 = vpop.f32.mrf.mxu0
  %v377 = vadd.f32 0.0, %v376
  %v378 = vpop.f32.mrf.mxu0
  %v379 = vadd.f32 0.0, %v378
  %380 = vdwg.mxu0
  %381 = vmatpush.bf16.msra.mxu0 %v178
  %382 = vmatpush.bf16.msra.mxu0 %v175
  %383 = vmatpush.bf16.msra.mxu0 %v172
  %384 = vmatpush.bf16.msra.mxu0 %v169
  %385 = vmatpush.bf16.msra.mxu0 %v166
  %386 = vmatpush.bf16.msra.mxu0 %v163
  %387 = vmatpush.bf16.msra.mxu0 %v160
  %388 = vmatpush.bf16.msra.mxu0 %v157
  %389 = vmatmul.bf16.gmra.mxu0 %v352
  %v390 = vpop.f32.mrf.mxu0
  %v391 = vadd.f32 0.0, %v390
  %v392 = vpop.f32.mrf.mxu0
  %v393 = vadd.f32 0.0, %v392
  %394 = vdwg.mxu0
  %v395 = vadd.f32 %v346, %v363
  %v396 = vadd.f32 %v349, %v365
  %v397 = vxor.u32 %v395, 2147483648
  %v398 = vxor.u32 %v396, 2147483648
  %v399 = vmul.f32 %v397, 1.442695
  %v400 = vpow.pop %v399
  %v401 = vmul.f32 %v398, 1.442695
  %v402 = vpow.pop %v401
  %v403 = vadd.f32 %v400, 1.0
  %v404 = vadd.f32 %v402, 1.0
  %v405 = vrcp.pop %v403
  %v406 = vmul.f32 %v403, %v405
  %v407 = vsub.f32 1.0, %v406
  %v408 = vmul.f32 %v405, %v407
  %v409 = vadd.f32 %v405, %v408
  %vm410 = vweird.f32 %v403
  %vm411 = vweird.f32 %v405
  %vm412 = vmor %vm410, %vm411
  %v413 = vsel %vm412, %v405, %v409
  %v414 = vand.u32 2147483647, %v403
  %vm415 = vcmp.eq.f32.partialorder %v414, 8.507059e+37
  %v416 = vand.u32 %v403, 2147483648
  %v417 = vor.u32 1.1754944e-38, %v416
  %v418 = vsel %vm415, %v417, %v413
  %v419 = vmul.f32 1.0, %v418
  %v420 = vrcp.pop %v404
  %v421 = vmul.f32 %v404, %v420
  %v422 = vsub.f32 1.0, %v421
  %v423 = vmul.f32 %v420, %v422
  %v424 = vadd.f32 %v420, %v423
  %vm425 = vweird.f32 %v404
  %vm426 = vweird.f32 %v420
  %vm427 = vmor %vm425, %vm426
  %v428 = vsel %vm427, %v420, %v424
  %v429 = vand.u32 2147483647, %v404
  %vm430 = vcmp.eq.f32.partialorder %v429, 8.507059e+37
  %v431 = vand.u32 %v404, 2147483648
  %v432 = vor.u32 1.1754944e-38, %v431
  %v433 = vsel %vm430, %v432, %v428
  %v434 = vmul.f32 1.0, %v433
  %v435 = vadd.f32 %v347, %v377
  %v436 = vadd.f32 %v350, %v379
  %v437 = vxor.u32 %v435, 2147483648
  %v438 = vxor.u32 %v436, 2147483648
  %v439 = vmul.f32 %v437, 1.442695
  %v440 = vpow.pop %v439
  %v441 = vmul.f32 %v438, 1.442695
  %v442 = vpow.pop %v441
  %v443 = vadd.f32 %v440, 1.0
  %v444 = vadd.f32 %v442, 1.0
  %v445 = vrcp.pop %v443
  %v446 = vmul.f32 %v443, %v445
  %v447 = vsub.f32 1.0, %v446
  %v448 = vmul.f32 %v445, %v447
  %v449 = vadd.f32 %v445, %v448
  %vm450 = vweird.f32 %v443
  %vm451 = vweird.f32 %v445
  %vm452 = vmor %vm450, %vm451
  %v453 = vsel %vm452, %v445, %v449
  %v454 = vand.u32 2147483647, %v443
  %vm455 = vcmp.eq.f32.partialorder %v454, 8.507059e+37
  %v456 = vand.u32 %v443, 2147483648
  %v457 = vor.u32 1.1754944e-38, %v456
  %v458 = vsel %vm455, %v457, %v453
  %v459 = vmul.f32 1.0, %v458
  %v460 = vrcp.pop %v444
  %v461 = vmul.f32 %v444, %v460
  %v462 = vsub.f32 1.0, %v461
  %v463 = vmul.f32 %v460, %v462
  %v464 = vadd.f32 %v460, %v463
  %vm465 = vweird.f32 %v444
  %vm466 = vweird.f32 %v460
  %vm467 = vmor %vm465, %vm466
  %v468 = vsel %vm467, %v460, %v464
  %v469 = vand.u32 2147483647, %v444
  %vm470 = vcmp.eq.f32.partialorder %v469, 8.507059e+37
  %v471 = vand.u32 %v444, 2147483648
  %v472 = vor.u32 1.1754944e-38, %v471
  %v473 = vsel %vm470, %v472, %v468
  %v474 = vmul.f32 1.0, %v473
  %v475 = vadd.f32 %v391, %v60
  %v476 = vadd.f32 %v393, %v60
  %v477 = vmul.f32 %v419, %v475
  %v478 = vmul.f32 %v434, %v476
  %v479 = vadd.f32 %v348, %v477
  %v480 = vadd.f32 %v351, %v478
  %v481 = vtanh.pop %v479
  %v482 = vtanh.pop %v480
  %v483 = vsub.f32 1.0, %v459
  %v484 = vsub.f32 1.0, %v474
  %v485 = vmul.f32 %v483, %v481
  %v486 = vmul.f32 %v484, %v482
  %v487 = vmul.f32 %v459, %v339
  %v488 = vmul.f32 %v474, %v340
  %v489 = vadd.f32 %v485, %v487
  %v490 = vadd.f32 %v486, %v488
  %s491 = scalar_lea.vmem %s0, 48
  %v492 = vld [vmem:[%s491] sm:$0xff]
  %v493 = vld [vmem:[%s491 + $0x8] sm:$0xf]
  %v494 = vld [vmem:[%s491 + $0xc] sm:$0xff]
  %v495 = vld [vmem:[%s491 + $0x14] sm:$0xf]
  %v496 = vunpack.c.l.bf16 %v492
  %v497 = vunpack.c.h.bf16 %v492
  %v498 = vunpack.c.l.bf16 %v493
  %v499 = vunpack.c.l.bf16 %v494
  %v500 = vunpack.c.h.bf16 %v494
  %v501 = vunpack.c.l.bf16 %v495
  %v502 = vpack.c.bf16 %v490, %v489
  %503 = vmatpush.bf16.msra.mxu0 %v176
  %504 = vmatpush.bf16.msra.mxu0 %v173
  %505 = vmatpush.bf16.msra.mxu0 %v170
  %506 = vmatpush.bf16.msra.mxu0 %v167
  %507 = vmatpush.bf16.msra.mxu0 %v164
  %508 = vmatpush.bf16.msra.mxu0 %v161
  %509 = vmatpush.bf16.msra.mxu0 %v158
  %510 = vmatpush.bf16.msra.mxu0 %v155
  %511 = vmatmul.bf16.gmra.mxu0 %v502
  %v512 = vpop.f32.mrf.mxu0
  %v513 = vadd.f32 0.0, %v512
  %v514 = vpop.f32.mrf.mxu0
  %v515 = vadd.f32 0.0, %v514
  %516 = vdwg.mxu0
  %517 = vmatpush.bf16.msra.mxu0 %v177
  %518 = vmatpush.bf16.msra.mxu0 %v174
  %519 = vmatpush.bf16.msra.mxu0 %v171
  %520 = vmatpush.bf16.msra.mxu0 %v168
  %521 = vmatpush.bf16.msra.mxu0 %v165
  %522 = vmatpush.bf16.msra.mxu0 %v162
  %523 = vmatpush.bf16.msra.mxu0 %v159
  %524 = vmatpush.bf16.msra.mxu0 %v156
  %525 = vmatmul.bf16.gmra.mxu0 %v502
  %v526 = vpop.f32.mrf.mxu0
  %v527 = vadd.f32 0.0, %v526
  %v528 = vpop.f32.mrf.mxu0
  %v529 = vadd.f32 0.0, %v528
  %530 = vdwg.mxu0
  %531 = vmatpush.bf16.msra.mxu0 %v178
  %532 = vmatpush.bf16.msra.mxu0 %v175
  %533 = vmatpush.bf16.msra.mxu0 %v172
  %534 = vmatpush.bf16.msra.mxu0 %v169
  %535 = vmatpush.bf16.msra.mxu0 %v166
  %536 = vmatpush.bf16.msra.mxu0 %v163
  %537 = vmatpush.bf16.msra.mxu0 %v160
  %538 = vmatpush.bf16.msra.mxu0 %v157
  %539 = vmatmul.bf16.gmra.mxu0 %v502
  %v540 = vpop.f32.mrf.mxu0
  %v541 = vadd.f32 0.0, %v540
  %v542 = vpop.f32.mrf.mxu0
  %v543 = vadd.f32 0.0, %v542
  %544 = vdwg.mxu0
  %v545 = vadd.f32 %v496, %v513
  %v546 = vadd.f32 %v499, %v515
  %v547 = vxor.u32 %v545, 2147483648
  %v548 = vxor.u32 %v546, 2147483648
  %v549 = vmul.f32 %v547, 1.442695
  %v550 = vpow.pop %v549
  %v551 = vmul.f32 %v548, 1.442695
  %v552 = vpow.pop %v551
  %v553 = vadd.f32 %v550, 1.0
  %v554 = vadd.f32 %v552, 1.0
  %v555 = vrcp.pop %v553
  %v556 = vmul.f32 %v553, %v555
  %v557 = vsub.f32 1.0, %v556
  %v558 = vmul.f32 %v555, %v557
  %v559 = vadd.f32 %v555, %v558
  %vm560 = vweird.f32 %v553
  %vm561 = vweird.f32 %v555
  %vm562 = vmor %vm560, %vm561
  %v563 = vsel %vm562, %v555, %v559
  %v564 = vand.u32 2147483647, %v553
  %vm565 = vcmp.eq.f32.partialorder %v564, 8.507059e+37
  %v566 = vand.u32 %v553, 2147483648
  %v567 = vor.u32 1.1754944e-38, %v566
  %v568 = vsel %vm565, %v567, %v563
  %v569 = vmul.f32 1.0, %v568
  %v570 = vrcp.pop %v554
  %v571 = vmul.f32 %v554, %v570
  %v572 = vsub.f32 1.0, %v571
  %v573 = vmul.f32 %v570, %v572
  %v574 = vadd.f32 %v570, %v573
  %vm575 = vweird.f32 %v554
  %vm576 = vweird.f32 %v570
  %vm577 = vmor %vm575, %vm576
  %v578 = vsel %vm577, %v570, %v574
  %v579 = vand.u32 2147483647, %v554
  %vm580 = vcmp.eq.f32.partialorder %v579, 8.507059e+37
  %v581 = vand.u32 %v554, 2147483648
  %v582 = vor.u32 1.1754944e-38, %v581
  %v583 = vsel %vm580, %v582, %v578
  %v584 = vmul.f32 1.0, %v583
  %v585 = vadd.f32 %v497, %v527
  %v586 = vadd.f32 %v500, %v529
  %v587 = vxor.u32 %v585, 2147483648
  %v588 = vxor.u32 %v586, 2147483648
  %v589 = vmul.f32 %v587, 1.442695
  %v590 = vpow.pop %v589
  %v591 = vmul.f32 %v588, 1.442695
  %v592 = vpow.pop %v591
  %v593 = vadd.f32 %v590, 1.0
  %v594 = vadd.f32 %v592, 1.0
  %v595 = vrcp.pop %v593
  %v596 = vmul.f32 %v593, %v595
  %v597 = vsub.f32 1.0, %v596
  %v598 = vmul.f32 %v595, %v597
  %v599 = vadd.f32 %v595, %v598
  %vm600 = vweird.f32 %v593
  %vm601 = vweird.f32 %v595
  %vm602 = vmor %vm600, %vm601
  %v603 = vsel %vm602, %v595, %v599
  %v604 = vand.u32 2147483647, %v593
  %vm605 = vcmp.eq.f32.partialorder %v604, 8.507059e+37
  %v606 = vand.u32 %v593, 2147483648
  %v607 = vor.u32 1.1754944e-38, %v606
  %v608 = vsel %vm605, %v607, %v603
  %v609 = vmul.f32 1.0, %v608
  %v610 = vrcp.pop %v594
  %v611 = vmul.f32 %v594, %v610
  %v612 = vsub.f32 1.0, %v611
  %v613 = vmul.f32 %v610, %v612
  %v614 = vadd.f32 %v610, %v613
  %vm615 = vweird.f32 %v594
  %vm616 = vweird.f32 %v610
  %vm617 = vmor %vm615, %vm616
  %v618 = vsel %vm617, %v610, %v614
  %v619 = vand.u32 2147483647, %v594
  %vm620 = vcmp.eq.f32.partialorder %v619, 8.507059e+37
  %v621 = vand.u32 %v594, 2147483648
  %v622 = vor.u32 1.1754944e-38, %v621
  %v623 = vsel %vm620, %v622, %v618
  %v624 = vmul.f32 1.0, %v623
  %v625 = vadd.f32 %v541, %v60
  %v626 = vadd.f32 %v543, %v60
  %v627 = vmul.f32 %v569, %v625
  %v628 = vmul.f32 %v584, %v626
  %v629 = vadd.f32 %v498, %v627
  %v630 = vadd.f32 %v501, %v628
  %v631 = vtanh.pop %v629
  %v632 = vtanh.pop %v630
  %v633 = vsub.f32 1.0, %v609
  %v634 = vsub.f32 1.0, %v624
  %v635 = vmul.f32 %v633, %v631
  %v636 = vmul.f32 %v634, %v632
  %v637 = vmul.f32 %v609, %v489
  %v638 = vmul.f32 %v624, %v490
  %v639 = vadd.f32 %v635, %v637
  %v640 = vadd.f32 %v636, %v638
  %s641 = scalar_lea.vmem %s0, 72
  %v642 = vld [vmem:[%s641] sm:$0xff]
  %v643 = vld [vmem:[%s641 + $0x8] sm:$0xf]
  %v644 = vld [vmem:[%s641 + $0xc] sm:$0xff]
  %v645 = vld [vmem:[%s641 + $0x14] sm:$0xf]
  %v646 = vunpack.c.l.bf16 %v642
  %v647 = vunpack.c.h.bf16 %v642
  %v648 = vunpack.c.l.bf16 %v643
  %v649 = vunpack.c.l.bf16 %v644
  %v650 = vunpack.c.h.bf16 %v644
  %v651 = vunpack.c.l.bf16 %v645
  %v652 = vpack.c.bf16 %v640, %v639
  %653 = vmatpush.bf16.msra.mxu0 %v176
  %654 = vmatpush.bf16.msra.mxu0 %v173
  %655 = vmatpush.bf16.msra.mxu0 %v170
  %656 = vmatpush.bf16.msra.mxu0 %v167
  %657 = vmatpush.bf16.msra.mxu0 %v164
  %658 = vmatpush.bf16.msra.mxu0 %v161
  %659 = vmatpush.bf16.msra.mxu0 %v158
  %660 = vmatpush.bf16.msra.mxu0 %v155
  %661 = vmatmul.bf16.gmra.mxu0 %v652
  %v662 = vpop.f32.mrf.mxu0
  %v663 = vadd.f32 0.0, %v662
  %v664 = vpop.f32.mrf.mxu0
  %v665 = vadd.f32 0.0, %v664
  %666 = vdwg.mxu0
  %667 = vmatpush.bf16.msra.mxu0 %v177
  %668 = vmatpush.bf16.msra.mxu0 %v174
  %669 = vmatpush.bf16.msra.mxu0 %v171
  %670 = vmatpush.bf16.msra.mxu0 %v168
  %671 = vmatpush.bf16.msra.mxu0 %v165
  %672 = vmatpush.bf16.msra.mxu0 %v162
  %673 = vmatpush.bf16.msra.mxu0 %v159
  %674 = vmatpush.bf16.msra.mxu0 %v156
  %675 = vmatmul.bf16.gmra.mxu0 %v652
  %v676 = vpop.f32.mrf.mxu0
  %v677 = vadd.f32 0.0, %v676
  %v678 = vpop.f32.mrf.mxu0
  %v679 = vadd.f32 0.0, %v678
  %680 = vdwg.mxu0
  %681 = vmatpush.bf16.msra.mxu0 %v178
  %682 = vmatpush.bf16.msra.mxu0 %v175
  %683 = vmatpush.bf16.msra.mxu0 %v172
  %684 = vmatpush.bf16.msra.mxu0 %v169
  %685 = vmatpush.bf16.msra.mxu0 %v166
  %686 = vmatpush.bf16.msra.mxu0 %v163
  %687 = vmatpush.bf16.msra.mxu0 %v160
  %688 = vmatpush.bf16.msra.mxu0 %v157
  %689 = vmatmul.bf16.gmra.mxu0 %v652
  %v690 = vpop.f32.mrf.mxu0
  %v691 = vadd.f32 0.0, %v690
  %v692 = vpop.f32.mrf.mxu0
  %v693 = vadd.f32 0.0, %v692
  %694 = vdwg.mxu0
  %v695 = vadd.f32 %v646, %v663
  %v696 = vadd.f32 %v649, %v665
  %v697 = vxor.u32 %v695, 2147483648
  %v698 = vxor.u32 %v696, 2147483648
  %v699 = vmul.f32 %v697, 1.442695
  %v700 = vpow.pop %v699
  %v701 = vmul.f32 %v698, 1.442695
  %v702 = vpow.pop %v701
  %v703 = vadd.f32 %v700, 1.0
  %v704 = vadd.f32 %v702, 1.0
  %v705 = vrcp.pop %v703
  %v706 = vmul.f32 %v703, %v705
  %v707 = vsub.f32 1.0, %v706
  %v708 = vmul.f32 %v705, %v707
  %v709 = vadd.f32 %v705, %v708
  %vm710 = vweird.f32 %v703
  %vm711 = vweird.f32 %v705
  %vm712 = vmor %vm710, %vm711
  %v713 = vsel %vm712, %v705, %v709
  %v714 = vand.u32 2147483647, %v703
  %vm715 = vcmp.eq.f32.partialorder %v714, 8.507059e+37
  %v716 = vand.u32 %v703, 2147483648
  %v717 = vor.u32 1.1754944e-38, %v716
  %v718 = vsel %vm715, %v717, %v713
  %v719 = vmul.f32 1.0, %v718
  %v720 = vrcp.pop %v704
  %v721 = vmul.f32 %v704, %v720
  %v722 = vsub.f32 1.0, %v721
  %v723 = vmul.f32 %v720, %v722
  %v724 = vadd.f32 %v720, %v723
  %vm725 = vweird.f32 %v704
  %vm726 = vweird.f32 %v720
  %vm727 = vmor %vm725, %vm726
  %v728 = vsel %vm727, %v720, %v724
  %v729 = vand.u32 2147483647, %v704
  %vm730 = vcmp.eq.f32.partialorder %v729, 8.507059e+37
  %v731 = vand.u32 %v704, 2147483648
  %v732 = vor.u32 1.1754944e-38, %v731
  %v733 = vsel %vm730, %v732, %v728
  %v734 = vmul.f32 1.0, %v733
  %v735 = vadd.f32 %v647, %v677
  %v736 = vadd.f32 %v650, %v679
  %v737 = vxor.u32 %v735, 2147483648
  %v738 = vxor.u32 %v736, 2147483648
  %v739 = vmul.f32 %v737, 1.442695
  %v740 = vpow.pop %v739
  %v741 = vmul.f32 %v738, 1.442695
  %v742 = vpow.pop %v741
  %v743 = vadd.f32 %v740, 1.0
  %v744 = vadd.f32 %v742, 1.0
  %v745 = vrcp.pop %v743
  %v746 = vmul.f32 %v743, %v745
  %v747 = vsub.f32 1.0, %v746
  %v748 = vmul.f32 %v745, %v747
  %v749 = vadd.f32 %v745, %v748
  %vm750 = vweird.f32 %v743
  %vm751 = vweird.f32 %v745
  %vm752 = vmor %vm750, %vm751
  %v753 = vsel %vm752, %v745, %v749
  %v754 = vand.u32 2147483647, %v743
  %vm755 = vcmp.eq.f32.partialorder %v754, 8.507059e+37
  %v756 = vand.u32 %v743, 2147483648
  %v757 = vor.u32 1.1754944e-38, %v756
  %v758 = vsel %vm755, %v757, %v753
  %v759 = vmul.f32 1.0, %v758
  %v760 = vrcp.pop %v744
  %v761 = vmul.f32 %v744, %v760
  %v762 = vsub.f32 1.0, %v761
  %v763 = vmul.f32 %v760, %v762
  %v764 = vadd.f32 %v760, %v763
  %vm765 = vweird.f32 %v744
  %vm766 = vweird.f32 %v760
  %vm767 = vmor %vm765, %vm766
  %v768 = vsel %vm767, %v760, %v764
  %v769 = vand.u32 2147483647, %v744
  %vm770 = vcmp.eq.f32.partialorder %v769, 8.507059e+37
  %v771 = vand.u32 %v744, 2147483648
  %v772 = vor.u32 1.1754944e-38, %v771
  %v773 = vsel %vm770, %v772, %v768
  %v774 = vmul.f32 1.0, %v773
  %v775 = vadd.f32 %v691, %v60
  %v776 = vadd.f32 %v693, %v60
  %v777 = vmul.f32 %v719, %v775
  %v778 = vmul.f32 %v734, %v776
  %v779 = vadd.f32 %v648, %v777
  %v780 = vadd.f32 %v651, %v778
  %v781 = vtanh.pop %v779
  %v782 = vtanh.pop %v780
  %v783 = vsub.f32 1.0, %v759
  %v784 = vsub.f32 1.0, %v774
  %v785 = vmul.f32 %v783, %v781
  %v786 = vmul.f32 %v784, %v782
  %v787 = vmul.f32 %v759, %v639
  %v788 = vmul.f32 %v774, %v640
  %v789 = vadd.f32 %v785, %v787
  %v790 = vadd.f32 %v786, %v788
  %s791 = scalar_lea.vmem %s0, 96
  %v792 = vld [vmem:[%s791] sm:$0xff]
  %v793 = vld [vmem:[%s791 + $0x8] sm:$0xf]
  %v794 = vld [vmem:[%s791 + $0xc] sm:$0xff]
  %v795 = vld [vmem:[%s791 + $0x14] sm:$0xf]
  %v796 = vunpack.c.l.bf16 %v792
  %v797 = vunpack.c.h.bf16 %v792
  %v798 = vunpack.c.l.bf16 %v793
  %v799 = vunpack.c.l.bf16 %v794
  %v800 = vunpack.c.h.bf16 %v794
  %v801 = vunpack.c.l.bf16 %v795
  %v802 = vpack.c.bf16 %v790, %v789
  %803 = vmatpush.bf16.msra.mxu0 %v176
  %804 = vmatpush.bf16.msra.mxu0 %v173
  %805 = vmatpush.bf16.msra.mxu0 %v170
  %806 = vmatpush.bf16.msra.mxu0 %v167
  %807 = vmatpush.bf16.msra.mxu0 %v164
  %808 = vmatpush.bf16.msra.mxu0 %v161
  %809 = vmatpush.bf16.msra.mxu0 %v158
  %810 = vmatpush.bf16.msra.mxu0 %v155
  %811 = vmatmul.bf16.gmra.mxu0 %v802
  %v812 = vpop.f32.mrf.mxu0
  %v813 = vadd.f32 0.0, %v812
  %v814 = vpop.f32.mrf.mxu0
  %v815 = vadd.f32 0.0, %v814
  %816 = vdwg.mxu0
  %817 = vmatpush.bf16.msra.mxu0 %v177
  %818 = vmatpush.bf16.msra.mxu0 %v174
  %819 = vmatpush.bf16.msra.mxu0 %v171
  %820 = vmatpush.bf16.msra.mxu0 %v168
  %821 = vmatpush.bf16.msra.mxu0 %v165
  %822 = vmatpush.bf16.msra.mxu0 %v162
  %823 = vmatpush.bf16.msra.mxu0 %v159
  %824 = vmatpush.bf16.msra.mxu0 %v156
  %825 = vmatmul.bf16.gmra.mxu0 %v802
  %v826 = vpop.f32.mrf.mxu0
  %v827 = vadd.f32 0.0, %v826
  %v828 = vpop.f32.mrf.mxu0
  %v829 = vadd.f32 0.0, %v828
  %830 = vdwg.mxu0
  %831 = vmatpush.bf16.msra.mxu0 %v178
  %832 = vmatpush.bf16.msra.mxu0 %v175
  %833 = vmatpush.bf16.msra.mxu0 %v172
  %834 = vmatpush.bf16.msra.mxu0 %v169
  %835 = vmatpush.bf16.msra.mxu0 %v166
  %836 = vmatpush.bf16.msra.mxu0 %v163
  %837 = vmatpush.bf16.msra.mxu0 %v160
  %838 = vmatpush.bf16.msra.mxu0 %v157
  %839 = vmatmul.bf16.gmra.mxu0 %v802
  %v840 = vpop.f32.mrf.mxu0
  %v841 = vadd.f32 0.0, %v840
  %v842 = vpop.f32.mrf.mxu0
  %v843 = vadd.f32 0.0, %v842
  %844 = vdwg.mxu0
  %v845 = vadd.f32 %v796, %v813
  %v846 = vadd.f32 %v799, %v815
  %v847 = vxor.u32 %v845, 2147483648
  %v848 = vxor.u32 %v846, 2147483648
  %v849 = vmul.f32 %v847, 1.442695
  %v850 = vpow.pop %v849
  %v851 = vmul.f32 %v848, 1.442695
  %v852 = vpow.pop %v851
  %v853 = vadd.f32 %v850, 1.0
  %v854 = vadd.f32 %v852, 1.0
  %v855 = vrcp.pop %v853
  %v856 = vmul.f32 %v853, %v855
  %v857 = vsub.f32 1.0, %v856
  %v858 = vmul.f32 %v855, %v857
  %v859 = vadd.f32 %v855, %v858
  %vm860 = vweird.f32 %v853
  %vm861 = vweird.f32 %v855
  %vm862 = vmor %vm860, %vm861
  %v863 = vsel %vm862, %v855, %v859
  %v864 = vand.u32 2147483647, %v853
  %vm865 = vcmp.eq.f32.partialorder %v864, 8.507059e+37
  %v866 = vand.u32 %v853, 2147483648
  %v867 = vor.u32 1.1754944e-38, %v866
  %v868 = vsel %vm865, %v867, %v863
  %v869 = vmul.f32 1.0, %v868
  %v870 = vrcp.pop %v854
  %v871 = vmul.f32 %v854, %v870
  %v872 = vsub.f32 1.0, %v871
  %v873 = vmul.f32 %v870, %v872
  %v874 = vadd.f32 %v870, %v873
  %vm875 = vweird.f32 %v854
  %vm876 = vweird.f32 %v870
  %vm877 = vmor %vm875, %vm876
  %v878 = vsel %vm877, %v870, %v874
  %v879 = vand.u32 2147483647, %v854
  %vm880 = vcmp.eq.f32.partialorder %v879, 8.507059e+37
  %v881 = vand.u32 %v854, 2147483648
  %v882 = vor.u32 1.1754944e-38, %v881
  %v883 = vsel %vm880, %v882, %v878
  %v884 = vmul.f32 1.0, %v883
  %v885 = vadd.f32 %v797, %v827
  %v886 = vadd.f32 %v800, %v829
  %v887 = vxor.u32 %v885, 2147483648
  %v888 = vxor.u32 %v886, 2147483648
  %v889 = vmul.f32 %v887, 1.442695
  %v890 = vpow.pop %v889
  %v891 = vmul.f32 %v888, 1.442695
  %v892 = vpow.pop %v891
  %v893 = vadd.f32 %v890, 1.0
  %v894 = vadd.f32 %v892, 1.0
  %v895 = vrcp.pop %v893
  %v896 = vmul.f32 %v893, %v895
  %v897 = vsub.f32 1.0, %v896
  %v898 = vmul.f32 %v895, %v897
  %v899 = vadd.f32 %v895, %v898
  %vm900 = vweird.f32 %v893
  %vm901 = vweird.f32 %v895
  %vm902 = vmor %vm900, %vm901
  %v903 = vsel %vm902, %v895, %v899
  %v904 = vand.u32 2147483647, %v893
  %vm905 = vcmp.eq.f32.partialorder %v904, 8.507059e+37
  %v906 = vand.u32 %v893, 2147483648
  %v907 = vor.u32 1.1754944e-38, %v906
  %v908 = vsel %vm905, %v907, %v903
  %v909 = vmul.f32 1.0, %v908
  %v910 = vrcp.pop %v894
  %v911 = vmul.f32 %v894, %v910
  %v912 = vsub.f32 1.0, %v911
  %v913 = vmul.f32 %v910, %v912
  %v914 = vadd.f32 %v910, %v913
  %vm915 = vweird.f32 %v894
  %vm916 = vweird.f32 %v910
  %vm917 = vmor %vm915, %vm916
  %v918 = vsel %vm917, %v910, %v914
  %v919 = vand.u32 2147483647, %v894
  %vm920 = vcmp.eq.f32.partialorder %v919, 8.507059e+37
  %v921 = vand.u32 %v894, 2147483648
  %v922 = vor.u32 1.1754944e-38, %v921
  %v923 = vsel %vm920, %v922, %v918
  %v924 = vmul.f32 1.0, %v923
  %v925 = vadd.f32 %v841, %v60
  %v926 = vadd.f32 %v843, %v60
  %v927 = vmul.f32 %v869, %v925
  %v928 = vmul.f32 %v884, %v926
  %v929 = vadd.f32 %v798, %v927
  %v930 = vadd.f32 %v801, %v928
  %v931 = vtanh.pop %v929
  %v932 = vtanh.pop %v930
  %v933 = vsub.f32 1.0, %v909
  %v934 = vsub.f32 1.0, %v924
  %v935 = vmul.f32 %v933, %v931
  %v936 = vmul.f32 %v934, %v932
  %v937 = vmul.f32 %v909, %v789
  %v938 = vmul.f32 %v924, %v790
  %v939 = vadd.f32 %v935, %v937
  %v940 = vadd.f32 %v936, %v938
  %s941 = scalar_lea.vmem %s0, 120
  %v942 = vld [vmem:[%s941] sm:$0xff]
  %v943 = vld [vmem:[%s941 + $0x8] sm:$0xf]
  %v944 = vld [vmem:[%s941 + $0xc] sm:$0xff]
  %v945 = vld [vmem:[%s941 + $0x14] sm:$0xf]
  %v946 = vunpack.c.l.bf16 %v942
  %v947 = vunpack.c.h.bf16 %v942
  %v948 = vunpack.c.l.bf16 %v943
  %v949 = vunpack.c.l.bf16 %v944
  %v950 = vunpack.c.h.bf16 %v944
  %v951 = vunpack.c.l.bf16 %v945
  %v952 = vpack.c.bf16 %v940, %v939
  %953 = vmatpush.bf16.msra.mxu0 %v176
  %954 = vmatpush.bf16.msra.mxu0 %v173
  %955 = vmatpush.bf16.msra.mxu0 %v170
  %956 = vmatpush.bf16.msra.mxu0 %v167
  %957 = vmatpush.bf16.msra.mxu0 %v164
  %958 = vmatpush.bf16.msra.mxu0 %v161
  %959 = vmatpush.bf16.msra.mxu0 %v158
  %960 = vmatpush.bf16.msra.mxu0 %v155
  %961 = vmatmul.bf16.gmra.mxu0 %v952
  %v962 = vpop.f32.mrf.mxu0
  %v963 = vadd.f32 0.0, %v962
  %v964 = vpop.f32.mrf.mxu0
  %v965 = vadd.f32 0.0, %v964
  %966 = vdwg.mxu0
  %967 = vmatpush.bf16.msra.mxu0 %v177
  %968 = vmatpush.bf16.msra.mxu0 %v174
  %969 = vmatpush.bf16.msra.mxu0 %v171
  %970 = vmatpush.bf16.msra.mxu0 %v168
  %971 = vmatpush.bf16.msra.mxu0 %v165
  %972 = vmatpush.bf16.msra.mxu0 %v162
  %973 = vmatpush.bf16.msra.mxu0 %v159
  %974 = vmatpush.bf16.msra.mxu0 %v156
  %975 = vmatmul.bf16.gmra.mxu0 %v952
  %v976 = vpop.f32.mrf.mxu0
  %v977 = vadd.f32 0.0, %v976
  %v978 = vpop.f32.mrf.mxu0
  %v979 = vadd.f32 0.0, %v978
  %980 = vdwg.mxu0
  %981 = vmatpush.bf16.msra.mxu0 %v178
  %982 = vmatpush.bf16.msra.mxu0 %v175
  %983 = vmatpush.bf16.msra.mxu0 %v172
  %984 = vmatpush.bf16.msra.mxu0 %v169
  %985 = vmatpush.bf16.msra.mxu0 %v166
  %986 = vmatpush.bf16.msra.mxu0 %v163
  %987 = vmatpush.bf16.msra.mxu0 %v160
  %988 = vmatpush.bf16.msra.mxu0 %v157
  %989 = vmatmul.bf16.gmra.mxu0 %v952
  %v990 = vpop.f32.mrf.mxu0
  %v991 = vadd.f32 0.0, %v990
  %v992 = vpop.f32.mrf.mxu0
  %v993 = vadd.f32 0.0, %v992
  %994 = vdwg.mxu0
  %v995 = vadd.f32 %v946, %v963
  %v996 = vadd.f32 %v949, %v965
  %v997 = vxor.u32 %v995, 2147483648
  %v998 = vxor.u32 %v996, 2147483648
  %v999 = vmul.f32 %v997, 1.442695
  %v1000 = vpow.pop %v999
  %v1001 = vmul.f32 %v998, 1.442695
  %v1002 = vpow.pop %v1001
  %v1003 = vadd.f32 %v1000, 1.0
  %v1004 = vadd.f32 %v1002, 1.0
  %v1005 = vrcp.pop %v1003
  %v1006 = vmul.f32 %v1003, %v1005
  %v1007 = vsub.f32 1.0, %v1006
  %v1008 = vmul.f32 %v1005, %v1007
  %v1009 = vadd.f32 %v1005, %v1008
  %vm1010 = vweird.f32 %v1003
  %vm1011 = vweird.f32 %v1005
  %vm1012 = vmor %vm1010, %vm1011
  %v1013 = vsel %vm1012, %v1005, %v1009
  %v1014 = vand.u32 2147483647, %v1003
  %vm1015 = vcmp.eq.f32.partialorder %v1014, 8.507059e+37
  %v1016 = vand.u32 %v1003, 2147483648
  %v1017 = vor.u32 1.1754944e-38, %v1016
  %v1018 = vsel %vm1015, %v1017, %v1013
  %v1019 = vmul.f32 1.0, %v1018
  %v1020 = vrcp.pop %v1004
  %v1021 = vmul.f32 %v1004, %v1020
  %v1022 = vsub.f32 1.0, %v1021
  %v1023 = vmul.f32 %v1020, %v1022
  %v1024 = vadd.f32 %v1020, %v1023
  %vm1025 = vweird.f32 %v1004
  %vm1026 = vweird.f32 %v1020
  %vm1027 = vmor %vm1025, %vm1026
  %v1028 = vsel %vm1027, %v1020, %v1024
  %v1029 = vand.u32 2147483647, %v1004
  %vm1030 = vcmp.eq.f32.partialorder %v1029, 8.507059e+37
  %v1031 = vand.u32 %v1004, 2147483648
  %v1032 = vor.u32 1.1754944e-38, %v1031
  %v1033 = vsel %vm1030, %v1032, %v1028
  %v1034 = vmul.f32 1.0, %v1033
  %v1035 = vadd.f32 %v947, %v977
  %v1036 = vadd.f32 %v950, %v979
  %v1037 = vxor.u32 %v1035, 2147483648
  %v1038 = vxor.u32 %v1036, 2147483648
  %v1039 = vmul.f32 %v1037, 1.442695
  %v1040 = vpow.pop %v1039
  %v1041 = vmul.f32 %v1038, 1.442695
  %v1042 = vpow.pop %v1041
  %v1043 = vadd.f32 %v1040, 1.0
  %v1044 = vadd.f32 %v1042, 1.0
  %v1045 = vrcp.pop %v1043
  %v1046 = vmul.f32 %v1043, %v1045
  %v1047 = vsub.f32 1.0, %v1046
  %v1048 = vmul.f32 %v1045, %v1047
  %v1049 = vadd.f32 %v1045, %v1048
  %vm1050 = vweird.f32 %v1043
  %vm1051 = vweird.f32 %v1045
  %vm1052 = vmor %vm1050, %vm1051
  %v1053 = vsel %vm1052, %v1045, %v1049
  %v1054 = vand.u32 2147483647, %v1043
  %vm1055 = vcmp.eq.f32.partialorder %v1054, 8.507059e+37
  %v1056 = vand.u32 %v1043, 2147483648
  %v1057 = vor.u32 1.1754944e-38, %v1056
  %v1058 = vsel %vm1055, %v1057, %v1053
  %v1059 = vmul.f32 1.0, %v1058
  %v1060 = vrcp.pop %v1044
  %v1061 = vmul.f32 %v1044, %v1060
  %v1062 = vsub.f32 1.0, %v1061
  %v1063 = vmul.f32 %v1060, %v1062
  %v1064 = vadd.f32 %v1060, %v1063
  %vm1065 = vweird.f32 %v1044
  %vm1066 = vweird.f32 %v1060
  %vm1067 = vmor %vm1065, %vm1066
  %v1068 = vsel %vm1067, %v1060, %v1064
  %v1069 = vand.u32 2147483647, %v1044
  %vm1070 = vcmp.eq.f32.partialorder %v1069, 8.507059e+37
  %v1071 = vand.u32 %v1044, 2147483648
  %v1072 = vor.u32 1.1754944e-38, %v1071
  %v1073 = vsel %vm1070, %v1072, %v1068
  %v1074 = vmul.f32 1.0, %v1073
  %v1075 = vadd.f32 %v991, %v60
  %v1076 = vadd.f32 %v993, %v60
  %v1077 = vmul.f32 %v1019, %v1075
  %v1078 = vmul.f32 %v1034, %v1076
  %v1079 = vadd.f32 %v948, %v1077
  %v1080 = vadd.f32 %v951, %v1078
  %v1081 = vtanh.pop %v1079
  %v1082 = vtanh.pop %v1080
  %v1083 = vsub.f32 1.0, %v1059
  %v1084 = vsub.f32 1.0, %v1074
  %v1085 = vmul.f32 %v1083, %v1081
  %v1086 = vmul.f32 %v1084, %v1082
  %v1087 = vmul.f32 %v1059, %v939
  %v1088 = vmul.f32 %v1074, %v940
  %v1089 = vadd.f32 %v1085, %v1087
  %v1090 = vadd.f32 %v1086, %v1088
  %s1091 = scalar_lea.vmem %s0, 144
  %v1092 = vld [vmem:[%s1091] sm:$0xff]
  %v1093 = vld [vmem:[%s1091 + $0x8] sm:$0xf]
  %v1094 = vld [vmem:[%s1091 + $0xc] sm:$0xff]
  %v1095 = vld [vmem:[%s1091 + $0x14] sm:$0xf]
  %v1096 = vunpack.c.l.bf16 %v1092
  %v1097 = vunpack.c.h.bf16 %v1092
  %v1098 = vunpack.c.l.bf16 %v1093
  %v1099 = vunpack.c.l.bf16 %v1094
  %v1100 = vunpack.c.h.bf16 %v1094
  %v1101 = vunpack.c.l.bf16 %v1095
  %v1102 = vpack.c.bf16 %v1090, %v1089
  %1103 = vmatpush.bf16.msra.mxu0 %v176
  %1104 = vmatpush.bf16.msra.mxu0 %v173
  %1105 = vmatpush.bf16.msra.mxu0 %v170
  %1106 = vmatpush.bf16.msra.mxu0 %v167
  %1107 = vmatpush.bf16.msra.mxu0 %v164
  %1108 = vmatpush.bf16.msra.mxu0 %v161
  %1109 = vmatpush.bf16.msra.mxu0 %v158
  %1110 = vmatpush.bf16.msra.mxu0 %v155
  %1111 = vmatmul.bf16.gmra.mxu0 %v1102
  %v1112 = vpop.f32.mrf.mxu0
  %v1113 = vadd.f32 0.0, %v1112
  %v1114 = vpop.f32.mrf.mxu0
  %v1115 = vadd.f32 0.0, %v1114
  %1116 = vdwg.mxu0
  %1117 = vmatpush.bf16.msra.mxu0 %v177
  %1118 = vmatpush.bf16.msra.mxu0 %v174
  %1119 = vmatpush.bf16.msra.mxu0 %v171
  %1120 = vmatpush.bf16.msra.mxu0 %v168
  %1121 = vmatpush.bf16.msra.mxu0 %v165
  %1122 = vmatpush.bf16.msra.mxu0 %v162
  %1123 = vmatpush.bf16.msra.mxu0 %v159
  %1124 = vmatpush.bf16.msra.mxu0 %v156
  %1125 = vmatmul.bf16.gmra.mxu0 %v1102
  %v1126 = vpop.f32.mrf.mxu0
  %v1127 = vadd.f32 0.0, %v1126
  %v1128 = vpop.f32.mrf.mxu0
  %v1129 = vadd.f32 0.0, %v1128
  %1130 = vdwg.mxu0
  %1131 = vmatpush.bf16.msra.mxu0 %v178
  %1132 = vmatpush.bf16.msra.mxu0 %v175
  %1133 = vmatpush.bf16.msra.mxu0 %v172
  %1134 = vmatpush.bf16.msra.mxu0 %v169
  %1135 = vmatpush.bf16.msra.mxu0 %v166
  %1136 = vmatpush.bf16.msra.mxu0 %v163
  %1137 = vmatpush.bf16.msra.mxu0 %v160
  %1138 = vmatpush.bf16.msra.mxu0 %v157
  %1139 = vmatmul.bf16.gmra.mxu0 %v1102
  %v1140 = vpop.f32.mrf.mxu0
  %v1141 = vadd.f32 0.0, %v1140
  %v1142 = vpop.f32.mrf.mxu0
  %v1143 = vadd.f32 0.0, %v1142
  %1144 = vdwg.mxu0
  %v1145 = vadd.f32 %v1096, %v1113
  %v1146 = vadd.f32 %v1099, %v1115
  %v1147 = vxor.u32 %v1145, 2147483648
  %v1148 = vxor.u32 %v1146, 2147483648
  %v1149 = vmul.f32 %v1147, 1.442695
  %v1150 = vpow.pop %v1149
  %v1151 = vmul.f32 %v1148, 1.442695
  %v1152 = vpow.pop %v1151
  %v1153 = vadd.f32 %v1150, 1.0
  %v1154 = vadd.f32 %v1152, 1.0
  %v1155 = vrcp.pop %v1153
  %v1156 = vmul.f32 %v1153, %v1155
  %v1157 = vsub.f32 1.0, %v1156
  %v1158 = vmul.f32 %v1155, %v1157
  %v1159 = vadd.f32 %v1155, %v1158
  %vm1160 = vweird.f32 %v1153
  %vm1161 = vweird.f32 %v1155
  %vm1162 = vmor %vm1160, %vm1161
  %v1163 = vsel %vm1162, %v1155, %v1159
  %v1164 = vand.u32 2147483647, %v1153
  %vm1165 = vcmp.eq.f32.partialorder %v1164, 8.507059e+37
  %v1166 = vand.u32 %v1153, 2147483648
  %v1167 = vor.u32 1.1754944e-38, %v1166
  %v1168 = vsel %vm1165, %v1167, %v1163
  %v1169 = vmul.f32 1.0, %v1168
  %v1170 = vrcp.pop %v1154
  %v1171 = vmul.f32 %v1154, %v1170
  %v1172 = vsub.f32 1.0, %v1171
  %v1173 = vmul.f32 %v1170, %v1172
  %v1174 = vadd.f32 %v1170, %v1173
  %vm1175 = vweird.f32 %v1154
  %vm1176 = vweird.f32 %v1170
  %vm1177 = vmor %vm1175, %vm1176
  %v1178 = vsel %vm1177, %v1170, %v1174
  %v1179 = vand.u32 2147483647, %v1154
  %vm1180 = vcmp.eq.f32.partialorder %v1179, 8.507059e+37
  %v1181 = vand.u32 %v1154, 2147483648
  %v1182 = vor.u32 1.1754944e-38, %v1181
  %v1183 = vsel %vm1180, %v1182, %v1178
  %v1184 = vmul.f32 1.0, %v1183
  %v1185 = vadd.f32 %v1097, %v1127
  %v1186 = vadd.f32 %v1100, %v1129
  %v1187 = vxor.u32 %v1185, 2147483648
  %v1188 = vxor.u32 %v1186, 2147483648
  %v1189 = vmul.f32 %v1187, 1.442695
  %v1190 = vpow.pop %v1189
  %v1191 = vmul.f32 %v1188, 1.442695
  %v1192 = vpow.pop %v1191
  %v1193 = vadd.f32 %v1190, 1.0
  %v1194 = vadd.f32 %v1192, 1.0
  %v1195 = vrcp.pop %v1193
  %v1196 = vmul.f32 %v1193, %v1195
  %v1197 = vsub.f32 1.0, %v1196
  %v1198 = vmul.f32 %v1195, %v1197
  %v1199 = vadd.f32 %v1195, %v1198
  %vm1200 = vweird.f32 %v1193
  %vm1201 = vweird.f32 %v1195
  %vm1202 = vmor %vm1200, %vm1201
  %v1203 = vsel %vm1202, %v1195, %v1199
  %v1204 = vand.u32 2147483647, %v1193
  %vm1205 = vcmp.eq.f32.partialorder %v1204, 8.507059e+37
  %v1206 = vand.u32 %v1193, 2147483648
  %v1207 = vor.u32 1.1754944e-38, %v1206
  %v1208 = vsel %vm1205, %v1207, %v1203
  %v1209 = vmul.f32 1.0, %v1208
  %v1210 = vrcp.pop %v1194
  %v1211 = vmul.f32 %v1194, %v1210
  %v1212 = vsub.f32 1.0, %v1211
  %v1213 = vmul.f32 %v1210, %v1212
  %v1214 = vadd.f32 %v1210, %v1213
  %vm1215 = vweird.f32 %v1194
  %vm1216 = vweird.f32 %v1210
  %vm1217 = vmor %vm1215, %vm1216
  %v1218 = vsel %vm1217, %v1210, %v1214
  %v1219 = vand.u32 2147483647, %v1194
  %vm1220 = vcmp.eq.f32.partialorder %v1219, 8.507059e+37
  %v1221 = vand.u32 %v1194, 2147483648
  %v1222 = vor.u32 1.1754944e-38, %v1221
  %v1223 = vsel %vm1220, %v1222, %v1218
  %v1224 = vmul.f32 1.0, %v1223
  %v1225 = vadd.f32 %v1141, %v60
  %v1226 = vadd.f32 %v1143, %v60
  %v1227 = vmul.f32 %v1169, %v1225
  %v1228 = vmul.f32 %v1184, %v1226
  %v1229 = vadd.f32 %v1098, %v1227
  %v1230 = vadd.f32 %v1101, %v1228
  %v1231 = vtanh.pop %v1229
  %v1232 = vtanh.pop %v1230
  %v1233 = vsub.f32 1.0, %v1209
  %v1234 = vsub.f32 1.0, %v1224
  %v1235 = vmul.f32 %v1233, %v1231
  %v1236 = vmul.f32 %v1234, %v1232
  %v1237 = vmul.f32 %v1209, %v1089
  %v1238 = vmul.f32 %v1224, %v1090
  %v1239 = vadd.f32 %v1235, %v1237
  %v1240 = vadd.f32 %v1236, %v1238
  %s1241 = scalar_lea.vmem %s0, 168
  %v1242 = vld [vmem:[%s1241] sm:$0xff]
  %v1243 = vld [vmem:[%s1241 + $0x8] sm:$0xf]
  %v1244 = vld [vmem:[%s1241 + $0xc] sm:$0xff]
  %v1245 = vld [vmem:[%s1241 + $0x14] sm:$0xf]
  %v1246 = vunpack.c.l.bf16 %v1242
  %v1247 = vunpack.c.h.bf16 %v1242
  %v1248 = vunpack.c.l.bf16 %v1243
  %v1249 = vunpack.c.l.bf16 %v1244
  %v1250 = vunpack.c.h.bf16 %v1244
  %v1251 = vunpack.c.l.bf16 %v1245
  %v1252 = vpack.c.bf16 %v1240, %v1239
  %1253 = vmatpush.bf16.msra.mxu0 %v176
  %1254 = vmatpush.bf16.msra.mxu0 %v173
  %1255 = vmatpush.bf16.msra.mxu0 %v170
  %1256 = vmatpush.bf16.msra.mxu0 %v167
  %1257 = vmatpush.bf16.msra.mxu0 %v164
  %1258 = vmatpush.bf16.msra.mxu0 %v161
  %1259 = vmatpush.bf16.msra.mxu0 %v158
  %1260 = vmatpush.bf16.msra.mxu0 %v155
  %1261 = vmatmul.bf16.gmra.mxu0 %v1252
  %v1262 = vpop.f32.mrf.mxu0
  %v1263 = vadd.f32 0.0, %v1262
  %v1264 = vpop.f32.mrf.mxu0
  %v1265 = vadd.f32 0.0, %v1264
  %1266 = vdwg.mxu0
  %1267 = vmatpush.bf16.msra.mxu0 %v177
  %1268 = vmatpush.bf16.msra.mxu0 %v174
  %1269 = vmatpush.bf16.msra.mxu0 %v171
  %1270 = vmatpush.bf16.msra.mxu0 %v168
  %1271 = vmatpush.bf16.msra.mxu0 %v165
  %1272 = vmatpush.bf16.msra.mxu0 %v162
  %1273 = vmatpush.bf16.msra.mxu0 %v159
  %1274 = vmatpush.bf16.msra.mxu0 %v156
  %1275 = vmatmul.bf16.gmra.mxu0 %v1252
  %v1276 = vpop.f32.mrf.mxu0
  %v1277 = vadd.f32 0.0, %v1276
  %v1278 = vpop.f32.mrf.mxu0
  %v1279 = vadd.f32 0.0, %v1278
  %1280 = vdwg.mxu0
  %1281 = vmatpush.bf16.msra.mxu0 %v178
  %1282 = vmatpush.bf16.msra.mxu0 %v175
  %1283 = vmatpush.bf16.msra.mxu0 %v172
  %1284 = vmatpush.bf16.msra.mxu0 %v169
  %1285 = vmatpush.bf16.msra.mxu0 %v166
  %1286 = vmatpush.bf16.msra.mxu0 %v163
  %1287 = vmatpush.bf16.msra.mxu0 %v160
  %1288 = vmatpush.bf16.msra.mxu0 %v157
  %1289 = vmatmul.bf16.gmra.mxu0 %v1252
  %v1290 = vpop.f32.mrf.mxu0
  %v1291 = vadd.f32 0.0, %v1290
  %v1292 = vpop.f32.mrf.mxu0
  %v1293 = vadd.f32 0.0, %v1292
  %1294 = vdwg.mxu0
  %v1295 = vadd.f32 %v1246, %v1263
  %v1296 = vadd.f32 %v1249, %v1265
  %v1297 = vxor.u32 %v1295, 2147483648
  %v1298 = vxor.u32 %v1296, 2147483648
  %v1299 = vmul.f32 %v1297, 1.442695
  %v1300 = vpow.pop %v1299
  %v1301 = vmul.f32 %v1298, 1.442695
  %v1302 = vpow.pop %v1301
  %v1303 = vadd.f32 %v1300, 1.0
  %v1304 = vadd.f32 %v1302, 1.0
  %v1305 = vrcp.pop %v1303
  %v1306 = vmul.f32 %v1303, %v1305
  %v1307 = vsub.f32 1.0, %v1306
  %v1308 = vmul.f32 %v1305, %v1307
  %v1309 = vadd.f32 %v1305, %v1308
  %vm1310 = vweird.f32 %v1303
  %vm1311 = vweird.f32 %v1305
  %vm1312 = vmor %vm1310, %vm1311
  %v1313 = vsel %vm1312, %v1305, %v1309
  %v1314 = vand.u32 2147483647, %v1303
  %vm1315 = vcmp.eq.f32.partialorder %v1314, 8.507059e+37
  %v1316 = vand.u32 %v1303, 2147483648
  %v1317 = vor.u32 1.1754944e-38, %v1316
  %v1318 = vsel %vm1315, %v1317, %v1313
  %v1319 = vmul.f32 1.0, %v1318
  %v1320 = vrcp.pop %v1304
  %v1321 = vmul.f32 %v1304, %v1320
  %v1322 = vsub.f32 1.0, %v1321
  %v1323 = vmul.f32 %v1320, %v1322
  %v1324 = vadd.f32 %v1320, %v1323
  %vm1325 = vweird.f32 %v1304
  %vm1326 = vweird.f32 %v1320
  %vm1327 = vmor %vm1325, %vm1326
  %v1328 = vsel %vm1327, %v1320, %v1324
  %v1329 = vand.u32 2147483647, %v1304
  %vm1330 = vcmp.eq.f32.partialorder %v1329, 8.507059e+37
  %v1331 = vand.u32 %v1304, 2147483648
  %v1332 = vor.u32 1.1754944e-38, %v1331
  %v1333 = vsel %vm1330, %v1332, %v1328
  %v1334 = vmul.f32 1.0, %v1333
  %v1335 = vadd.f32 %v1247, %v1277
  %v1336 = vadd.f32 %v1250, %v1279
  %v1337 = vxor.u32 %v1335, 2147483648
  %v1338 = vxor.u32 %v1336, 2147483648
  %v1339 = vmul.f32 %v1337, 1.442695
  %v1340 = vpow.pop %v1339
  %v1341 = vmul.f32 %v1338, 1.442695
  %v1342 = vpow.pop %v1341
  %v1343 = vadd.f32 %v1340, 1.0
  %v1344 = vadd.f32 %v1342, 1.0
  %v1345 = vrcp.pop %v1343
  %v1346 = vmul.f32 %v1343, %v1345
  %v1347 = vsub.f32 1.0, %v1346
  %v1348 = vmul.f32 %v1345, %v1347
  %v1349 = vadd.f32 %v1345, %v1348
  %vm1350 = vweird.f32 %v1343
  %vm1351 = vweird.f32 %v1345
  %vm1352 = vmor %vm1350, %vm1351
  %v1353 = vsel %vm1352, %v1345, %v1349
  %v1354 = vand.u32 2147483647, %v1343
  %vm1355 = vcmp.eq.f32.partialorder %v1354, 8.507059e+37
  %v1356 = vand.u32 %v1343, 2147483648
  %v1357 = vor.u32 1.1754944e-38, %v1356
  %v1358 = vsel %vm1355, %v1357, %v1353
  %v1359 = vmul.f32 1.0, %v1358
  %v1360 = vrcp.pop %v1344
  %v1361 = vmul.f32 %v1344, %v1360
  %v1362 = vsub.f32 1.0, %v1361
  %v1363 = vmul.f32 %v1360, %v1362
  %v1364 = vadd.f32 %v1360, %v1363
  %vm1365 = vweird.f32 %v1344
  %vm1366 = vweird.f32 %v1360
  %vm1367 = vmor %vm1365, %vm1366
  %v1368 = vsel %vm1367, %v1360, %v1364
  %v1369 = vand.u32 2147483647, %v1344
  %vm1370 = vcmp.eq.f32.partialorder %v1369, 8.507059e+37
  %v1371 = vand.u32 %v1344, 2147483648
  %v1372 = vor.u32 1.1754944e-38, %v1371
  %v1373 = vsel %vm1370, %v1372, %v1368
  %v1374 = vmul.f32 1.0, %v1373
  %v1375 = vadd.f32 %v1291, %v60
  %v1376 = vadd.f32 %v1293, %v60
  %v1377 = vmul.f32 %v1319, %v1375
  %v1378 = vmul.f32 %v1334, %v1376
  %v1379 = vadd.f32 %v1248, %v1377
  %v1380 = vadd.f32 %v1251, %v1378
  %v1381 = vtanh.pop %v1379
  %v1382 = vtanh.pop %v1380
  %v1383 = vsub.f32 1.0, %v1359
  %v1384 = vsub.f32 1.0, %v1374
  %v1385 = vmul.f32 %v1383, %v1381
  %v1386 = vmul.f32 %v1384, %v1382
  %v1387 = vmul.f32 %v1359, %v1239
  %v1388 = vmul.f32 %v1374, %v1240
  %v1389 = vadd.f32 %v1385, %v1387
  %v1390 = vadd.f32 %v1386, %v1388
  %1391 = vst [vmem:[#allocation2] sm:$0xff] %v1389
  %1392 = vst [vmem:[#allocation2 + $0x8] sm:$0xff] %v1390
  // Predicated region
  $region26: #{ball_predictor_forward.1} parent=0 // pred_check
    %p1393 = pneg %p20
  $region27: #{ball_predictor_forward.1} parent=0 // pred_check_branch
    %1395 = sbr.rel (%p1393) target = $region29
  $region28: #{ball_predictor_forward.1} parent=0 // pred_region
    %v1396 = vpack.c.bf16 %v1390, %v1389
    %v1397 = vld [vmem:[%s3] sm:$0xf]
    %v1398 = vld [vmem:[%s3 + $0x4] sm:$0xf]
    %v1399 = vld [vmem:[%s3 + $0x8] sm:$0xf]
    %v1400 = vld [vmem:[%s3 + $0xc] sm:$0xf]
    %v1401 = vld [vmem:[%s3 + $0x10] sm:$0xf]
    %v1402 = vld [vmem:[%s3 + $0x14] sm:$0xf]
    %v1403 = vld [vmem:[%s3 + $0x18] sm:$0xf]
    %v1404 = vld [vmem:[%s3 + $0x1c] sm:$0xf]
    %v1405 = vld [vmem:[%s3 + $0x20] sm:$0xf]
    %v1406 = vld [vmem:[%s3 + $0x24] sm:$0xf]
    %v1407 = vld [vmem:[%s3 + $0x28] sm:$0xf]
    %v1408 = vld [vmem:[%s3 + $0x2c] sm:$0xf]
    %v1409 = vld [vmem:[%s3 + $0x30] sm:$0xf]
    %v1410 = vld [vmem:[%s3 + $0x34] sm:$0xf]
    %v1411 = vld [vmem:[%s3 + $0x38] sm:$0xf]
    %v1412 = vld [vmem:[%s3 + $0x3c] sm:$0xf]
    %v1413 = vld [vmem:[%s4] sm:$0x1]
    %v1415 = vperm.slane %v1413, 0
    %v1433 = vunpack.c.l.b16 %v1397
    %v1434 = vunpack.c.l.b16 %v1398
    %v1435 = vunpack.c.l.b16 %v1399
    %v1436 = vunpack.c.l.b16 %v1400
    %v1437 = vunpack.c.l.b16 %v1401
    %v1438 = vunpack.c.l.b16 %v1402
    %v1439 = vunpack.c.l.b16 %v1403
    %v1440 = vunpack.c.l.b16 %v1404
    %v1441 = vunpack.c.l.b16 %v1405
    %v1442 = vunpack.c.l.b16 %v1406
    %v1443 = vunpack.c.l.b16 %v1407
    %v1444 = vunpack.c.l.b16 %v1408
    %v1445 = vunpack.c.l.b16 %v1409
    %v1446 = vunpack.c.l.b16 %v1410
    %v1447 = vunpack.c.l.b16 %v1411
    %v1448 = vunpack.c.l.b16 %v1412
    %v1449 = vpack.c.b16 %v1434, %v1433
    %v1450 = vpack.c.b16 %v1436, %v1435
    %v1451 = vpack.c.b16 %v1438, %v1437
    %v1452 = vpack.c.b16 %v1440, %v1439
    %v1453 = vpack.c.b16 %v1442, %v1441
    %v1454 = vpack.c.b16 %v1444, %v1443
    %v1455 = vpack.c.b16 %v1446, %v1445
    %v1456 = vpack.c.b16 %v1448, %v1447
    %1465 = vmatpush.bf16.msra.mxu0 %v1456
    %1466 = vmatpush.bf16.msra.mxu0 %v1455
    %1467 = vmatpush.bf16.msra.mxu0 %v1454
    %1468 = vmatpush.bf16.msra.mxu0 %v1453
    %1469 = vmatpush.bf16.msra.mxu0 %v1452
    %1470 = vmatpush.bf16.msra.mxu0 %v1451
    %1471 = vmatpush.bf16.msra.mxu0 %v1450
    %1472 = vmatpush.bf16.msra.mxu0 %v1449
    %1473 = vmatmul.bf16.gmra.mxu0 %v1396
    %v1474 = vpop.f32.mrf.mxu0
    %v1475 = vadd.f32 %v1415, %v1474
    %v1476 = vpop.f32.mrf.mxu0
    %v1477 = vadd.f32 %v1415, %v1476
    %1478 = vdwg.mxu0
    %1479 = vst [vmem:[%s5] sm:$0xff] %v1475
    %1480 = vst [vmem:[%s5 + $0x8] sm:$0xff] %v1477
  $region29: #{ball_predictor_forward.1} parent=0 // pred_fallthru
    _
  // Predicated region
  $region30: #{ball_predictor_forward.1} parent=0 // pred_check
    _
  $region31: #{ball_predictor_forward.1} parent=0 // pred_check_branch
    %1482 = sbr.rel (0) target = $region33
  $region32: #{ball_predictor_forward.1} parent=0 // pred_region
    _
  $region33: #{ball_predictor_forward.1} parent=0 // pred_fallthru
    _
  // Predicated region
  $region34: #{ball_predictor_forward.1} parent=0 // pred_check
    _
  $region35: #{ball_predictor_forward.1} parent=0 // pred_check_branch
    %1484 = sbr.rel (0) target = $region37
  $region36: #{ball_predictor_forward.1} parent=0 // pred_region
    _
  $region37: #{ball_predictor_forward.1} parent=0 // pred_fallthru
    _

</llo_original>
